<compile_context>
chip_gen: v7x
topology: tpu7x:2x2x1
jax: 0.10.0
libtpu: 0.0.40
codegen_flags: <defaults>
</compile_context>

<pallas_src>
import math

import jax
import jax.numpy as jnp
from jax.experimental import pallas as pl
from jax.experimental.pallas import tpu as pltpu

IGNORE_LABEL = 255
BD_THRESH = 0.6
BD_LOGIT_THRESH = math.log(BD_THRESH / (1.0 - BD_THRESH))  # sigmoid(x) > 0.6  <=>  x > logit(0.6)
BD_COEFF = 20.0
AUX_W, MAIN_W = 0.4, 1.0   # sem_loss balance weights for outputs[:-1]
SB_W = 0.5                 # sem_loss weight for the boundary-gated call

# statistic rows accumulated in the kernel:
#  0 ce_aux_sum   1 ce_main_sum  2 ce_valid_cnt  3 ce_sb_sum   4 ce_sb_cnt
#  5 acc_correct  6 acc_pixels   7 bce_pos_sum   8 bce_neg_sum 9 pos_cnt  10 neg_cnt
NUM_STATS = 11
STAT_ROWS = 16     # NUM_STATS padded to a sublane multiple for the per-batch partials block
STAT_LANES = 128


def _round_up(x, m):
    return (x + m - 1) // m * m


# ---------------------------------------------------------------------------
# Fused kernel: 1x1-conv heads + loss/metric partial sums, per (batch, pixel-tile)
# ---------------------------------------------------------------------------
def fused_heads_loss_kernel(x_ref, w_ref, b_ref, lab_ref, bdgt_ref,
                            aux_ref, main_ref, stats_ref, ssum_ref):
    p = pl.program_id(1)
    K = aux_ref.shape[1]
    T = aux_ref.shape[2]
    K8 = _round_up(K, 8)   # sublane-aligned start of the main head rows; boundary row at 2*K8

    # per-batch running sums live as SMEM scalars: zero at the start of every batch sweep
    @pl.when(p == 0)
    def _():
        for k in range(NUM_STATS):
            ssum_ref[k] = jnp.float32(0.0)

    # ---- 1x1-conv heads on the MXU: bf16 x bf16 -> f32, (Krows, Cin) @ (Cin, T) ----
    x = x_ref[0]
    if x.dtype != w_ref.dtype:            # only if the caller handed us f32 features
        x = x.astype(w_ref.dtype)
    logits = jnp.dot(w_ref[...], x, preferred_element_type=jnp.float32) + b_ref[...]

    aux = logits[:K, :]                    # (K, T)
    mainl = logits[K8:K8 + K, :]           # (K, T), sublane-aligned slice start -> no relayout
    bd = logits[2 * K8:2 * K8 + 1, :]      # (1, T), sublane-aligned

    aux_ref[0] = aux.astype(aux_ref.dtype)
    main_ref[0] = mainl.astype(main_ref.dtype)

    # ---- per-pixel loss / metric rows (all (1, T)) ----
    lab = lab_ref[0]                       # (1, T) int32
    bdgt = bdgt_ref[0]                     # (1, T) f32
    iota = jax.lax.broadcasted_iota(jnp.int32, (K, T), 0)
    onehot = iota == lab                   # computed once, reused by both CE evaluations

    def ce_per_pixel(lg):
        m = jnp.max(lg, axis=0, keepdims=True)
        lse = jnp.log(jnp.sum(jnp.exp(lg - m), axis=0, keepdims=True)) + m
        picked = jnp.sum(jnp.where(onehot, lg, 0.0), axis=0, keepdims=True)
        return lse - picked

    # lab == -1 marks wrapper-added pixel padding: excluded from every statistic.
    real = lab >= 0
    valid = jnp.logical_and(real, lab != IGNORE_LABEL)
    validf = valid.astype(jnp.float32)
    ce_aux_pix = ce_per_pixel(aux)
    ce_main_pix = ce_per_pixel(mainl)

    # boundary-gated CE reuses ce_main_pix; only the validity mask changes:
    # valid_gated = (lab != 255) AND (sigmoid(bd) > 0.6)
    gate = bd > BD_LOGIT_THRESH
    gate_validf = jnp.logical_and(valid, gate).astype(jnp.float32)

    # pixel_acc on the main head (torch.max first-index semantics); valid = (label >= 0),
    # matching the reference code (ignore pixels count in the denominator, never correct)
    maxv = jnp.max(mainl, axis=0, keepdims=True)
    preds = jnp.min(jnp.where(mainl == maxv, iota, K), axis=0, keepdims=True)
    valid_accf = real.astype(jnp.float32)
    correctf = jnp.logical_and(real, preds == lab).astype(jnp.float32)

    # BCE-with-logits partial sums for the boundary loss (pos/neg balanced in the wrapper)
    bce = jnp.maximum(bd, 0.0) - bd * bdgt + jnp.log1p(jnp.exp(-jnp.abs(bd)))
    posf = (bdgt == 1.0).astype(jnp.float32)
    negf = (bdgt == 0.0).astype(jnp.float32)

    # ---- one reduction per statistic per tile, accumulated as SMEM scalars ----
    # (replaces the old (NUM_STATS, tile_p) VMEM accumulator and its 11 strided single-sublane
    #  read-modify-writes per tile, which saturated the vector-store slot, worst on v5e)
    partials = (
        ce_aux_pix * validf,        # 0 ce_aux_sum
        ce_main_pix * validf,       # 1 ce_main_sum
        validf,                     # 2 ce_valid_cnt
        ce_main_pix * gate_validf,  # 3 ce_sb_sum
        gate_validf,                # 4 ce_sb_cnt
        correctf,                   # 5 acc_correct
        valid_accf,                 # 6 acc_pixels
        bce * posf,                 # 7 bce_pos_sum
        bce * negf,                 # 8 bce_neg_sum
        posf,                       # 9 pos_cnt
        negf,                       # 10 neg_cnt
    )
    for k, row in enumerate(partials):
        ssum_ref[k] = ssum_ref[k] + jnp.sum(row)

    # ---- per-batch flush: splat the scalars into this batch's (STAT_ROWS, 128) output block ----
    @pl.when(p == pl.num_programs(1) - 1)
    def _():
        rows = jax.lax.broadcasted_iota(jnp.int32, (STAT_ROWS, STAT_LANES), 0)
        slab = jnp.zeros((STAT_ROWS, STAT_LANES), jnp.float32)
        for k in range(NUM_STATS):
            slab = jnp.where(rows == k, ssum_ref[k], slab)
        stats_ref[0] = slab


def _pick_tile_p(hw, max_tile=8192):
    """Pixel-tile size: a multiple of 128, as large as reasonable. The wrapper pads H*W up to a
    multiple of it (label=-1 / bd_gt=-1 padding) instead of falling back to tiny tiles."""
    return min(max_tile, _round_up(hw, 128))


# ---------------------------------------------------------------------------
# FullModel.forward
# ---------------------------------------------------------------------------
def full_model_forward(inputs, labels, bd_gt, params, num_classes,
                       tile_p=None, logits_dtype=jnp.float32):
    # inputs: (N, Cin, H, W) backbone features (bf16 preferred; f32 accepted, cast in-kernel)
    # labels/bd_gt: (N, H, W)
    # params: 1x1-conv head params: w_aux/w_main (K, Cin), w_bd (1, Cin), b_aux/b_main (K,), b_bd (1,)
    N, Cin, H, W = inputs.shape
    HW = H * W
    K = num_classes
    K8 = _round_up(K, 8)
    Krows = _round_up(2 * K8 + 1, 8)   # aux rows [0,K), main rows [K8,K8+K), boundary row 2*K8

    # sublane-aligned padded head weight matrix; bf16 is the native MXU dtype on v5e/v6e/v7x.
    w = jnp.zeros((Krows, Cin), jnp.float32)
    w = w.at[0:K].set(params["w_aux"].astype(jnp.float32))
    w = w.at[K8:K8 + K].set(params["w_main"].astype(jnp.float32))
    w = w.at[2 * K8:2 * K8 + 1].set(params["w_bd"].astype(jnp.float32).reshape(1, Cin))
    w = w.astype(jnp.bfloat16)
    b = jnp.zeros((Krows, 1), jnp.float32)
    b = b.at[0:K, 0].set(params["b_aux"].astype(jnp.float32))
    b = b.at[K8:K8 + K, 0].set(params["b_main"].astype(jnp.float32))
    b = b.at[2 * K8, 0].set(params["b_bd"].astype(jnp.float32).reshape(()))

    if tile_p is None:
        tile_p = _pick_tile_p(HW)
    assert tile_p % 128 == 0
    HWp = _round_up(HW, tile_p)

    # NCHW -> (N, Cin, H*W) is a pure reshape. No wrapper-side dtype cast of the features:
    # the old bf16 pre-cast *added* an HBM round trip on a memory-bound kernel.
    x3 = inputs.reshape(N, Cin, HW)
    lab3 = labels.reshape(N, 1, HW).astype(jnp.int32)
    bd3 = bd_gt.reshape(N, 1, HW).astype(jnp.float32)
    if HWp != HW:
        pad = HWp - HW
        x3 = jnp.pad(x3, ((0, 0), (0, 0), (0, pad)))
        lab3 = jnp.pad(lab3, ((0, 0), (0, 0), (0, pad)), constant_values=-1)   # excluded everywhere
        bd3 = jnp.pad(bd3, ((0, 0), (0, 0), (0, pad)), constant_values=-1.0)   # neither pos nor neg

    grid = (N, HWp // tile_p)

    # VMEM budget from the actual tile footprint (double-buffered streams + temporaries),
    # clamped so it also fits within a single v7x TensorCore's 64 MiB.
    x_bytes = jnp.dtype(x3.dtype).itemsize
    o_bytes = jnp.dtype(logits_dtype).itemsize
    stream_bytes = 2 * tile_p * (Cin * x_bytes + 2 * K * o_bytes + 8)   # double-buffered in/out tiles
    temp_bytes = 4 * tile_p * (Krows + 4 * K + 16)                      # logits + CE intermediates
    vmem_limit = int(min(64 << 20, max(32 << 20, stream_bytes + temp_bytes + (4 << 20))))

    aux3, main3, stats_nk = pl.pallas_call(
        fused_heads_loss_kernel,
        out_shape=(
            jax.ShapeDtypeStruct((N, K, HWp), logits_dtype),
            jax.ShapeDtypeStruct((N, K, HWp), logits_dtype),
            jax.ShapeDtypeStruct((N, STAT_ROWS, STAT_LANES), jnp.float32),
        ),
        grid_spec=pltpu.PrefetchScalarGridSpec(
            num_scalar_prefetch=0,
            grid=grid,
            in_specs=[
                pl.BlockSpec((1, Cin, tile_p), lambda n, p: (n, 0, p)),   # feature tile
                pl.BlockSpec((Krows, Cin), lambda n, p: (0, 0)),          # head weights (resident)
                pl.BlockSpec((Krows, 1), lambda n, p: (0, 0)),            # head biases
                pl.BlockSpec((1, 1, tile_p), lambda n, p: (n, 0, p)),     # labels tile
                pl.BlockSpec((1, 1, tile_p), lambda n, p: (n, 0, p)),     # bd_gt tile
            ],
            out_specs=[
                pl.BlockSpec((1, K, tile_p), lambda n, p: (n, 0, p)),     # aux logits
                pl.BlockSpec((1, K, tile_p), lambda n, p: (n, 0, p)),     # main logits
                pl.BlockSpec((1, STAT_ROWS, STAT_LANES), lambda n, p: (n, 0, 0)),  # per-batch stats
            ],
            scratch_shapes=[pltpu.SMEM((NUM_STATS,), jnp.float32)],       # per-batch running sums
        ),
        compiler_params=pltpu.CompilerParams(
            # Batch axis is "parallel": stats are per-batch partials (combined in the wrapper),
            # so a v7x dual-TensorCore split is safe; this is a no-op on single-TC v5e/v6e.
            # The pixel axis carries the stat accumulation -> "arbitrary".
            dimension_semantics=("parallel", "arbitrary"),
            vmem_limit_bytes=vmem_limit,
        ),
    )(x3, w, b, lab3, bd3)

    if HWp != HW:
        aux3 = aux3[:, :, :HW]
        main3 = main3[:, :, :HW]
    # free reshapes back to NCHW (layout is already pixel-major per batch, no transpose)
    aux_nchw = aux3.reshape(N, K, H, W)
    main_nchw = main3.reshape(N, K, H, W)
    # TODO(synk): F.interpolate(bilinear) resize branch not needed — heads emit at label resolution.

    # combine per-batch partial sums (tiny: N x 16 x 128 floats)
    stats = jnp.sum(stats_nk[:, :NUM_STATS, 0], axis=0)

    def safe_div(s, c):
        return jnp.where(c > 0, s / jnp.maximum(c, 1.0), 0.0)

    ce_aux = safe_div(stats[0], stats[2])
    ce_main = safe_div(stats[1], stats[2])
    ce_sb = safe_div(stats[3], stats[4])

    acc = stats[5] / (stats[6] + 1e-10)

    loss_s = AUX_W * ce_aux + MAIN_W * ce_main
    loss_sb = SB_W * ce_sb

    pos_c, neg_c = stats[9], stats[10]
    total = jnp.maximum(pos_c + neg_c, 1.0)
    w_pos = neg_c / total
    w_neg = pos_c / total
    bce_mean = (w_pos * stats[7] + w_neg * stats[8]) / total
    loss_b = BD_COEFF * bce_mean

    # matches the reference source: loss = loss_s + loss_sb (loss_b is returned separately)
    loss = loss_s + loss_sb
    return (
        jnp.expand_dims(loss, 0),
        [aux_nchw, main_nchw],
        acc,
        [loss_s, loss_b],
    )


# ---------------------------------------------------------------------------
if __name__ == "__main__":
    N, Cin, H, W = 2, 4, 16, 16
    K = 4   # num semantic classes

    key = jax.random.PRNGKey(0)
    kx, kl, kign, kbd, kwa, kwm, kwb, kba, kbm, kbb = jax.random.split(key, 10)

    # synthetic backbone features, emitted in bf16 (so no cast op exists anywhere in the wrapper)
    inputs = jax.random.normal(kx, (N, Cin, H, W), dtype=jnp.float32).astype(jnp.bfloat16)

    labels = jax.random.randint(kl, (N, H, W), 0, K, dtype=jnp.int32)
    ign_mask = jax.random.uniform(kign, (N, H, W)) < 0.1
    labels = jnp.where(ign_mask, IGNORE_LABEL, labels)

    bd_gt = (jax.random.uniform(kbd, (N, H, W)) > 0.7).astype(jnp.float32)

    # deterministic synthetic 1x1-conv head parameters
    params = {
        "w_aux": 0.1 * jax.random.normal(kwa, (K, Cin), dtype=jnp.float32),
        "w_main": 0.1 * jax.random.normal(kwm, (K, Cin), dtype=jnp.float32),
        "w_bd": 0.1 * jax.random.normal(kwb, (1, Cin), dtype=jnp.float32),
        "b_aux": 0.05 * jax.random.normal(kba, (K,), dtype=jnp.float32),
        "b_main": 0.05 * jax.random.normal(kbm, (K,), dtype=jnp.float32),
        "b_bd": 0.05 * jax.random.normal(kbb, (1,), dtype=jnp.float32),
    }

    # tile_p=128 -> grid (N, H*W // 128) = (2, 2): exercises the per-batch multi-tile accumulation
    result = full_model_forward(inputs, labels, bd_gt, params, num_classes=K, tile_p=128)
    jax.block_until_ready(result)

    loss, outs, acc, (loss_s, loss_b) = result
    assert loss.shape == (1,)
    assert outs[0].shape == (N, K, H, W) and outs[1].shape == (N, K, H, W)
    assert jnp.isfinite(loss).all() and jnp.isfinite(acc)
    assert jnp.isfinite(loss_s) and jnp.isfinite(loss_b)
    print("KERNEL_OK")
</pallas_src>

<mosaic_0001>
module attributes {stable_mosaic.version = 11 : i64} {
  func.func @fused_heads_loss_kernel(%arg0: i32, %arg1: i32, %arg2: memref<1x4x128xbf16, #tpu.memory_space<vmem>>, %arg3: memref<24x4xbf16, #tpu.memory_space<vmem>>, %arg4: memref<24x1xf32, #tpu.memory_space<vmem>>, %arg5: memref<1x1x128xi32, #tpu.memory_space<vmem>>, %arg6: memref<1x1x128xf32, #tpu.memory_space<vmem>>, %arg7: memref<1x4x128xf32, #tpu.memory_space<vmem>>, %arg8: memref<1x4x128xf32, #tpu.memory_space<vmem>>, %arg9: memref<1x16x128xf32, #tpu.memory_space<vmem>>, %arg10: memref<11xf32, #tpu.memory_space<smem>>) attributes {dimension_semantics = [#tpu.dimension_semantics<parallel>, #tpu.dimension_semantics<arbitrary>], iteration_bounds = array<i64: 2, 2>, scalar_prefetch = 0 : i64, scratch_operands = 1 : i64, tpu.core_type = #tpu.core_type<tc>, window_params = [{transform_indices = @transform_0, window_bounds = array<i64: 1, 4, 128>}, {pipeline_mode = #tpu.pipeline_mode<synchronous>, transform_indices = @transform_1, window_bounds = array<i64: 24, 4>}, {pipeline_mode = #tpu.pipeline_mode<synchronous>, transform_indices = @transform_2, window_bounds = array<i64: 24, 1>}, {transform_indices = @transform_3, window_bounds = array<i64: 1, 1, 128>}, {transform_indices = @transform_4, window_bounds = array<i64: 1, 1, 128>}, {transform_indices = @transform_5, window_bounds = array<i64: 1, 4, 128>}, {transform_indices = @transform_6, window_bounds = array<i64: 1, 4, 128>}, {transform_indices = @transform_7, window_bounds = array<i64: 1, 16, 128>}]} {
    %c0_i32 = arith.constant 0 : i32
    %0 = arith.cmpi eq, %arg1, %c0_i32 : i32
    %1 = arith.extui %0 : i1 to i32
    %c0_i32_0 = arith.constant 0 : i32
    %2 = arith.cmpi ne, %1, %c0_i32_0 : i32
    scf.if %2 {
      %cst_59 = arith.constant 0.000000e+00 : f32
      %c0_60 = arith.constant 0 : index
      %183 = memref.load %arg10[%c0_60] : memref<11xf32, #tpu.memory_space<smem>>
      memref.store %cst_59, %arg10[%c0_60] : memref<11xf32, #tpu.memory_space<smem>>
      %cst_61 = arith.constant 0.000000e+00 : f32
      %c1_62 = arith.constant 1 : index
      %184 = memref.load %arg10[%c1_62] : memref<11xf32, #tpu.memory_space<smem>>
      memref.store %cst_61, %arg10[%c1_62] : memref<11xf32, #tpu.memory_space<smem>>
      %cst_63 = arith.constant 0.000000e+00 : f32
      %c2_64 = arith.constant 2 : index
      %185 = memref.load %arg10[%c2_64] : memref<11xf32, #tpu.memory_space<smem>>
      memref.store %cst_63, %arg10[%c2_64] : memref<11xf32, #tpu.memory_space<smem>>
      %cst_65 = arith.constant 0.000000e+00 : f32
      %c3_66 = arith.constant 3 : index
      %186 = memref.load %arg10[%c3_66] : memref<11xf32, #tpu.memory_space<smem>>
      memref.store %cst_65, %arg10[%c3_66] : memref<11xf32, #tpu.memory_space<smem>>
      %cst_67 = arith.constant 0.000000e+00 : f32
      %c4_68 = arith.constant 4 : index
      %187 = memref.load %arg10[%c4_68] : memref<11xf32, #tpu.memory_space<smem>>
      memref.store %cst_67, %arg10[%c4_68] : memref<11xf32, #tpu.memory_space<smem>>
      %cst_69 = arith.constant 0.000000e+00 : f32
      %c5_70 = arith.constant 5 : index
      %188 = memref.load %arg10[%c5_70] : memref<11xf32, #tpu.memory_space<smem>>
      memref.store %cst_69, %arg10[%c5_70] : memref<11xf32, #tpu.memory_space<smem>>
      %cst_71 = arith.constant 0.000000e+00 : f32
      %c6_72 = arith.constant 6 : index
      %189 = memref.load %arg10[%c6_72] : memref<11xf32, #tpu.memory_space<smem>>
      memref.store %cst_71, %arg10[%c6_72] : memref<11xf32, #tpu.memory_space<smem>>
      %cst_73 = arith.constant 0.000000e+00 : f32
      %c7_74 = arith.constant 7 : index
      %190 = memref.load %arg10[%c7_74] : memref<11xf32, #tpu.memory_space<smem>>
      memref.store %cst_73, %arg10[%c7_74] : memref<11xf32, #tpu.memory_space<smem>>
      %cst_75 = arith.constant 0.000000e+00 : f32
      %c8_76 = arith.constant 8 : index
      %191 = memref.load %arg10[%c8_76] : memref<11xf32, #tpu.memory_space<smem>>
      memref.store %cst_75, %arg10[%c8_76] : memref<11xf32, #tpu.memory_space<smem>>
      %cst_77 = arith.constant 0.000000e+00 : f32
      %c9_78 = arith.constant 9 : index
      %192 = memref.load %arg10[%c9_78] : memref<11xf32, #tpu.memory_space<smem>>
      memref.store %cst_77, %arg10[%c9_78] : memref<11xf32, #tpu.memory_space<smem>>
      %cst_79 = arith.constant 0.000000e+00 : f32
      %c10_80 = arith.constant 10 : index
      %193 = memref.load %arg10[%c10_80] : memref<11xf32, #tpu.memory_space<smem>>
      memref.store %cst_79, %arg10[%c10_80] : memref<11xf32, #tpu.memory_space<smem>>
    } else {
    }
    %c0 = arith.constant 0 : index
    %c0_1 = arith.constant 0 : index
    %c0_2 = arith.constant 0 : index
    %3 = vector.load %arg2[%c0, %c0_1, %c0_2] : memref<1x4x128xbf16, #tpu.memory_space<vmem>>, vector<1x4x128xbf16>
    %4 = vector.shape_cast %3 : vector<1x4x128xbf16> to vector<4x128xbf16>
    %c0_3 = arith.constant 0 : index
    %c0_4 = arith.constant 0 : index
    %5 = vector.load %arg3[%c0_3, %c0_4] : memref<24x4xbf16, #tpu.memory_space<vmem>>, vector<24x4xbf16>
    %cst = arith.constant dense<0.000000e+00> : vector<24x128xf32>
    %6 = tpu.matmul %5, %4, %cst {dimension_numbers = #tpu.dot_dimension_numbers<[1], [0], [0], [1], [0, 0, 1, 1], [], []>} : vector<24x4xbf16>, vector<4x128xbf16>, vector<24x128xf32> -> vector<24x128xf32>
    %c0_5 = arith.constant 0 : index
    %c0_6 = arith.constant 0 : index
    %7 = vector.load %arg4[%c0_5, %c0_6] : memref<24x1xf32, #tpu.memory_space<vmem>>, vector<24x1xf32>
    %8 = vector.broadcast %7 : vector<24x1xf32> to vector<24x128xf32>
    %9 = arith.addf %6, %8 : vector<24x128xf32>
    %10 = vector.extract_strided_slice %9 {offsets = [0, 0], sizes = [4, 128], strides = [1, 1]} : vector<24x128xf32> to vector<4x128xf32>
    %11 = vector.extract_strided_slice %9 {offsets = [8, 0], sizes = [4, 128], strides = [1, 1]} : vector<24x128xf32> to vector<4x128xf32>
    %12 = vector.extract_strided_slice %9 {offsets = [16, 0], sizes = [1, 128], strides = [1, 1]} : vector<24x128xf32> to vector<1x128xf32>
    %c0_7 = arith.constant 0 : index
    %c0_8 = arith.constant 0 : index
    %c0_9 = arith.constant 0 : index
    %13 = vector.load %arg7[%c0_7, %c0_8, %c0_9] : memref<1x4x128xf32, #tpu.memory_space<vmem>>, vector<1x4x128xf32>
    %14 = vector.shape_cast %13 : vector<1x4x128xf32> to vector<4x128xf32>
    %15 = vector.shape_cast %10 : vector<4x128xf32> to vector<1x4x128xf32>
    tpu.vector_store %arg7[%c0_7, %c0_8, %c0_9], %15 {strides = array<i32>} : memref<1x4x128xf32, #tpu.memory_space<vmem>>, vector<1x4x128xf32>,
    %c0_10 = arith.constant 0 : index
    %c0_11 = arith.constant 0 : index
    %c0_12 = arith.constant 0 : index
    %16 = vector.load %arg8[%c0_10, %c0_11, %c0_12] : memref<1x4x128xf32, #tpu.memory_space<vmem>>, vector<1x4x128xf32>
    %17 = vector.shape_cast %16 : vector<1x4x128xf32> to vector<4x128xf32>
    %18 = vector.shape_cast %11 : vector<4x128xf32> to vector<1x4x128xf32>
    tpu.vector_store %arg8[%c0_10, %c0_11, %c0_12], %18 {strides = array<i32>} : memref<1x4x128xf32, #tpu.memory_space<vmem>>, vector<1x4x128xf32>,
    %c0_13 = arith.constant 0 : index
    %c0_14 = arith.constant 0 : index
    %c0_15 = arith.constant 0 : index
    %19 = vector.load %arg5[%c0_13, %c0_14, %c0_15] : memref<1x1x128xi32, #tpu.memory_space<vmem>>, vector<1x1x128xi32>
    %20 = vector.shape_cast %19 : vector<1x1x128xi32> to vector<1x128xi32>
    %c0_16 = arith.constant 0 : index
    %c0_17 = arith.constant 0 : index
    %c0_18 = arith.constant 0 : index
    %21 = vector.load %arg6[%c0_16, %c0_17, %c0_18] : memref<1x1x128xf32, #tpu.memory_space<vmem>>, vector<1x1x128xf32>
    %22 = vector.shape_cast %21 : vector<1x1x128xf32> to vector<1x128xf32>
    %23 = tpu.iota {dimensions = array<i32: 0>} : vector<4x128xi32>
    %24 = vector.broadcast %20 : vector<1x128xi32> to vector<4x128xi32>
    %25 = arith.cmpi eq, %23, %24 : vector<4x128xi32>
    %c0_i32_19 = arith.constant 0 : i32
    %26 = vector.broadcast %c0_i32_19 : i32 to vector<1x128xi32>
    %27 = arith.cmpi sge, %20, %26 : vector<1x128xi32>
    %c255_i32 = arith.constant 255 : i32
    %28 = vector.broadcast %c255_i32 : i32 to vector<1x128xi32>
    %29 = arith.cmpi ne, %20, %28 : vector<1x128xi32>
    %30 = arith.andi %27, %29 : vector<1x128xi1>
    %31 = arith.extui %30 : vector<1x128xi1> to vector<1x128xi32>
    %32 = arith.sitofp %31 : vector<1x128xi32> to vector<1x128xf32>
    %cst_20 = arith.constant dense<0xFF800000> : vector<128xf32>
    %33 = vector.multi_reduction <maximumf>, %10, %cst_20 [0] : vector<4x128xf32> to vector<128xf32>
    %34 = vector.shape_cast %33 : vector<128xf32> to vector<1x128xf32>
    %35 = vector.broadcast %34 : vector<1x128xf32> to vector<4x128xf32>
    %36 = arith.subf %10, %35 : vector<4x128xf32>
    %37 = math.exp %36 : vector<4x128xf32>
    %cst_21 = arith.constant dense<0.000000e+00> : vector<128xf32>
    %38 = vector.multi_reduction <add>, %37, %cst_21 [0] : vector<4x128xf32> to vector<128xf32>
    %39 = vector.shape_cast %38 : vector<128xf32> to vector<1x128xf32>
    %40 = math.log %39 : vector<1x128xf32>
    %41 = arith.addf %40, %34 : vector<1x128xf32>
    %cst_22 = arith.constant 0.000000e+00 : f32
    %42 = vector.broadcast %cst_22 : f32 to vector<4x128xf32>
    %43 = arith.select %25, %10, %42 : vector<4x128xi1>, vector<4x128xf32>
    %cst_23 = arith.constant dense<0.000000e+00> : vector<128xf32>
    %44 = vector.multi_reduction <add>, %43, %cst_23 [0] : vector<4x128xf32> to vector<128xf32>
    %45 = vector.shape_cast %44 : vector<128xf32> to vector<1x128xf32>
    %46 = arith.subf %41, %45 : vector<1x128xf32>
    %cst_24 = arith.constant dense<0xFF800000> : vector<128xf32>
    %47 = vector.multi_reduction <maximumf>, %11, %cst_24 [0] : vector<4x128xf32> to vector<128xf32>
    %48 = vector.shape_cast %47 : vector<128xf32> to vector<1x128xf32>
    %49 = vector.broadcast %48 : vector<1x128xf32> to vector<4x128xf32>
    %50 = arith.subf %11, %49 : vector<4x128xf32>
    %51 = math.exp %50 : vector<4x128xf32>
    %cst_25 = arith.constant dense<0.000000e+00> : vector<128xf32>
    %52 = vector.multi_reduction <add>, %51, %cst_25 [0] : vector<4x128xf32> to vector<128xf32>
    %53 = vector.shape_cast %52 : vector<128xf32> to vector<1x128xf32>
    %54 = math.log %53 : vector<1x128xf32>
    %55 = arith.addf %54, %48 : vector<1x128xf32>
    %cst_26 = arith.constant 0.000000e+00 : f32
    %56 = vector.broadcast %cst_26 : f32 to vector<4x128xf32>
    %57 = arith.select %25, %11, %56 : vector<4x128xi1>, vector<4x128xf32>
    %cst_27 = arith.constant dense<0.000000e+00> : vector<128xf32>
    %58 = vector.multi_reduction <add>, %57, %cst_27 [0] : vector<4x128xf32> to vector<128xf32>
    %59 = vector.shape_cast %58 : vector<128xf32> to vector<1x128xf32>
    %60 = arith.subf %55, %59 : vector<1x128xf32>
    %cst_28 = arith.constant 0.405465096 : f32
    %61 = vector.broadcast %cst_28 : f32 to vector<1x128xf32>
    %62 = arith.cmpf ogt, %12, %61 : vector<1x128xf32>
    %63 = arith.andi %30, %62 : vector<1x128xi1>
    %64 = arith.extui %63 : vector<1x128xi1> to vector<1x128xi32>
    %65 = arith.sitofp %64 : vector<1x128xi32> to vector<1x128xf32>
    %cst_29 = arith.constant dense<0xFF800000> : vector<128xf32>
    %66 = vector.multi_reduction <maximumf>, %11, %cst_29 [0] : vector<4x128xf32> to vector<128xf32>
    %67 = vector.shape_cast %66 : vector<128xf32> to vector<1x128xf32>
    %68 = vector.broadcast %67 : vector<1x128xf32> to vector<4x128xf32>
    %69 = arith.cmpf oeq, %11, %68 : vector<4x128xf32>
    %c4_i32 = arith.constant 4 : i32
    %70 = vector.broadcast %c4_i32 : i32 to vector<4x128xi32>
    %71 = arith.select %69, %23, %70 : vector<4x128xi1>, vector<4x128xi32>
    %cst_30 = arith.constant dense<2147483647> : vector<128xi32>
    %72 = vector.multi_reduction <minsi>, %71, %cst_30 [0] : vector<4x128xi32> to vector<128xi32>
    %73 = vector.shape_cast %72 : vector<128xi32> to vector<1x128xi32>
    %74 = arith.extui %27 : vector<1x128xi1> to vector<1x128xi32>
    %75 = arith.sitofp %74 : vector<1x128xi32> to vector<1x128xf32>
    %76 = arith.cmpi eq, %73, %20 : vector<1x128xi32>
    %77 = arith.andi %27, %76 : vector<1x128xi1>
    %78 = arith.extui %77 : vector<1x128xi1> to vector<1x128xi32>
    %79 = arith.sitofp %78 : vector<1x128xi32> to vector<1x128xf32>
    %cst_31 = arith.constant 0.000000e+00 : f32
    %80 = vector.broadcast %cst_31 : f32 to vector<1x128xf32>
    %81 = arith.maximumf %12, %80 : vector<1x128xf32>
    %82 = arith.mulf %12, %22 : vector<1x128xf32>
    %83 = arith.subf %81, %82 : vector<1x128xf32>
    %84 = math.absf %12 : vector<1x128xf32>
    %cst_32 = arith.constant 0.000000e+00 : f32
    %85 = vector.broadcast %cst_32 : f32 to vector<1x128xf32>
    %86 = arith.subf %85, %84 : vector<1x128xf32>
    %87 = math.exp %86 : vector<1x128xf32>
    %88 = math.log1p %87 : vector<1x128xf32>
    %89 = arith.addf %83, %88 : vector<1x128xf32>
    %cst_33 = arith.constant 1.000000e+00 : f32
    %90 = vector.broadcast %cst_33 : f32 to vector<1x128xf32>
    %91 = arith.cmpf oeq, %22, %90 : vector<1x128xf32>
    %92 = arith.extui %91 : vector<1x128xi1> to vector<1x128xi32>
    %93 = arith.sitofp %92 : vector<1x128xi32> to vector<1x128xf32>
    %cst_34 = arith.constant 0.000000e+00 : f32
    %94 = vector.broadcast %cst_34 : f32 to vector<1x128xf32>
    %95 = arith.cmpf oeq, %22, %94 : vector<1x128xf32>
    %96 = arith.extui %95 : vector<1x128xi1> to vector<1x128xi32>
    %97 = arith.sitofp %96 : vector<1x128xi32> to vector<1x128xf32>
    %98 = arith.mulf %46, %32 : vector<1x128xf32>
    %99 = arith.mulf %60, %32 : vector<1x128xf32>
    %100 = arith.mulf %60, %65 : vector<1x128xf32>
    %101 = arith.mulf %89, %93 : vector<1x128xf32>
    %102 = arith.mulf %89, %97 : vector<1x128xf32>
    %c0_35 = arith.constant 0 : index
    %103 = memref.load %arg10[%c0_35] : memref<11xf32, #tpu.memory_space<smem>>
    %104 = vector.shape_cast %98 : vector<1x128xf32> to vector<1x1x128xf32>
    %cst_36 = arith.constant dense<0.000000e+00> : vector<1xf32>
    %105 = vector.multi_reduction <add>, %104, %cst_36 [1, 2] : vector<1x1x128xf32> to vector<1xf32>
    %106 = vector.shape_cast %105 : vector<1xf32> to vector<1x1x1xf32>
    %107 = vector.extract %106[0, 0, 0] : f32 from vector<1x1x1xf32>
    %108 = arith.addf %103, %107 : f32
    %c0_37 = arith.constant 0 : index
    %109 = memref.load %arg10[%c0_37] : memref<11xf32, #tpu.memory_space<smem>>
    memref.store %108, %arg10[%c0_37] : memref<11xf32, #tpu.memory_space<smem>>
    %c1 = arith.constant 1 : index
    %110 = memref.load %arg10[%c1] : memref<11xf32, #tpu.memory_space<smem>>
    %111 = vector.shape_cast %99 : vector<1x128xf32> to vector<1x1x128xf32>
    %cst_38 = arith.constant dense<0.000000e+00> : vector<1xf32>
    %112 = vector.multi_reduction <add>, %111, %cst_38 [1, 2] : vector<1x1x128xf32> to vector<1xf32>
    %113 = vector.shape_cast %112 : vector<1xf32> to vector<1x1x1xf32>
    %114 = vector.extract %113[0, 0, 0] : f32 from vector<1x1x1xf32>
    %115 = arith.addf %110, %114 : f32
    %c1_39 = arith.constant 1 : index
    %116 = memref.load %arg10[%c1_39] : memref<11xf32, #tpu.memory_space<smem>>
    memref.store %115, %arg10[%c1_39] : memref<11xf32, #tpu.memory_space<smem>>
    %c2 = arith.constant 2 : index
    %117 = memref.load %arg10[%c2] : memref<11xf32, #tpu.memory_space<smem>>
    %118 = vector.shape_cast %32 : vector<1x128xf32> to vector<1x1x128xf32>
    %cst_40 = arith.constant dense<0.000000e+00> : vector<1xf32>
    %119 = vector.multi_reduction <add>, %118, %cst_40 [1, 2] : vector<1x1x128xf32> to vector<1xf32>
    %120 = vector.shape_cast %119 : vector<1xf32> to vector<1x1x1xf32>
    %121 = vector.extract %120[0, 0, 0] : f32 from vector<1x1x1xf32>
    %122 = arith.addf %117, %121 : f32
    %c2_41 = arith.constant 2 : index
    %123 = memref.load %arg10[%c2_41] : memref<11xf32, #tpu.memory_space<smem>>
    memref.store %122, %arg10[%c2_41] : memref<11xf32, #tpu.memory_space<smem>>
    %c3 = arith.constant 3 : index
    %124 = memref.load %arg10[%c3] : memref<11xf32, #tpu.memory_space<smem>>
    %125 = vector.shape_cast %100 : vector<1x128xf32> to vector<1x1x128xf32>
    %cst_42 = arith.constant dense<0.000000e+00> : vector<1xf32>
    %126 = vector.multi_reduction <add>, %125, %cst_42 [1, 2] : vector<1x1x128xf32> to vector<1xf32>
    %127 = vector.shape_cast %126 : vector<1xf32> to vector<1x1x1xf32>
    %128 = vector.extract %127[0, 0, 0] : f32 from vector<1x1x1xf32>
    %129 = arith.addf %124, %128 : f32
    %c3_43 = arith.constant 3 : index
    %130 = memref.load %arg10[%c3_43] : memref<11xf32, #tpu.memory_space<smem>>
    memref.store %129, %arg10[%c3_43] : memref<11xf32, #tpu.memory_space<smem>>
    %c4 = arith.constant 4 : index
    %131 = memref.load %arg10[%c4] : memref<11xf32, #tpu.memory_space<smem>>
    %132 = vector.shape_cast %65 : vector<1x128xf32> to vector<1x1x128xf32>
    %cst_44 = arith.constant dense<0.000000e+00> : vector<1xf32>
    %133 = vector.multi_reduction <add>, %132, %cst_44 [1, 2] : vector<1x1x128xf32> to vector<1xf32>
    %134 = vector.shape_cast %133 : vector<1xf32> to vector<1x1x1xf32>
    %135 = vector.extract %134[0, 0, 0] : f32 from vector<1x1x1xf32>
    %136 = arith.addf %131, %135 : f32
    %c4_45 = arith.constant 4 : index
    %137 = memref.load %arg10[%c4_45] : memref<11xf32, #tpu.memory_space<smem>>
    memref.store %136, %arg10[%c4_45] : memref<11xf32, #tpu.memory_space<smem>>
    %c5 = arith.constant 5 : index
    %138 = memref.load %arg10[%c5] : memref<11xf32, #tpu.memory_space<smem>>
    %139 = vector.shape_cast %79 : vector<1x128xf32> to vector<1x1x128xf32>
    %cst_46 = arith.constant dense<0.000000e+00> : vector<1xf32>
    %140 = vector.multi_reduction <add>, %139, %cst_46 [1, 2] : vector<1x1x128xf32> to vector<1xf32>
    %141 = vector.shape_cast %140 : vector<1xf32> to vector<1x1x1xf32>
    %142 = vector.extract %141[0, 0, 0] : f32 from vector<1x1x1xf32>
    %143 = arith.addf %138, %142 : f32
    %c5_47 = arith.constant 5 : index
    %144 = memref.load %arg10[%c5_47] : memref<11xf32, #tpu.memory_space<smem>>
    memref.store %143, %arg10[%c5_47] : memref<11xf32, #tpu.memory_space<smem>>
    %c6 = arith.constant 6 : index
    %145 = memref.load %arg10[%c6] : memref<11xf32, #tpu.memory_space<smem>>
    %146 = vector.shape_cast %75 : vector<1x128xf32> to vector<1x1x128xf32>
    %cst_48 = arith.constant dense<0.000000e+00> : vector<1xf32>
    %147 = vector.multi_reduction <add>, %146, %cst_48 [1, 2] : vector<1x1x128xf32> to vector<1xf32>
    %148 = vector.shape_cast %147 : vector<1xf32> to vector<1x1x1xf32>
    %149 = vector.extract %148[0, 0, 0] : f32 from vector<1x1x1xf32>
    %150 = arith.addf %145, %149 : f32
    %c6_49 = arith.constant 6 : index
    %151 = memref.load %arg10[%c6_49] : memref<11xf32, #tpu.memory_space<smem>>
    memref.store %150, %arg10[%c6_49] : memref<11xf32, #tpu.memory_space<smem>>
    %c7 = arith.constant 7 : index
    %152 = memref.load %arg10[%c7] : memref<11xf32, #tpu.memory_space<smem>>
    %153 = vector.shape_cast %101 : vector<1x128xf32> to vector<1x1x128xf32>
    %cst_50 = arith.constant dense<0.000000e+00> : vector<1xf32>
    %154 = vector.multi_reduction <add>, %153, %cst_50 [1, 2] : vector<1x1x128xf32> to vector<1xf32>
    %155 = vector.shape_cast %154 : vector<1xf32> to vector<1x1x1xf32>
    %156 = vector.extract %155[0, 0, 0] : f32 from vector<1x1x1xf32>
    %157 = arith.addf %152, %156 : f32
    %c7_51 = arith.constant 7 : index
    %158 = memref.load %arg10[%c7_51] : memref<11xf32, #tpu.memory_space<smem>>
    memref.store %157, %arg10[%c7_51] : memref<11xf32, #tpu.memory_space<smem>>
    %c8 = arith.constant 8 : index
    %159 = memref.load %arg10[%c8] : memref<11xf32, #tpu.memory_space<smem>>
    %160 = vector.shape_cast %102 : vector<1x128xf32> to vector<1x1x128xf32>
    %cst_52 = arith.constant dense<0.000000e+00> : vector<1xf32>
    %161 = vector.multi_reduction <add>, %160, %cst_52 [1, 2] : vector<1x1x128xf32> to vector<1xf32>
    %162 = vector.shape_cast %161 : vector<1xf32> to vector<1x1x1xf32>
    %163 = vector.extract %162[0, 0, 0] : f32 from vector<1x1x1xf32>
    %164 = arith.addf %159, %163 : f32
    %c8_53 = arith.constant 8 : index
    %165 = memref.load %arg10[%c8_53] : memref<11xf32, #tpu.memory_space<smem>>
    memref.store %164, %arg10[%c8_53] : memref<11xf32, #tpu.memory_space<smem>>
    %c9 = arith.constant 9 : index
    %166 = memref.load %arg10[%c9] : memref<11xf32, #tpu.memory_space<smem>>
    %167 = vector.shape_cast %93 : vector<1x128xf32> to vector<1x1x128xf32>
    %cst_54 = arith.constant dense<0.000000e+00> : vector<1xf32>
    %168 = vector.multi_reduction <add>, %167, %cst_54 [1, 2] : vector<1x1x128xf32> to vector<1xf32>
    %169 = vector.shape_cast %168 : vector<1xf32> to vector<1x1x1xf32>
    %170 = vector.extract %169[0, 0, 0] : f32 from vector<1x1x1xf32>
    %171 = arith.addf %166, %170 : f32
    %c9_55 = arith.constant 9 : index
    %172 = memref.load %arg10[%c9_55] : memref<11xf32, #tpu.memory_space<smem>>
    memref.store %171, %arg10[%c9_55] : memref<11xf32, #tpu.memory_space<smem>>
    %c10 = arith.constant 10 : index
    %173 = memref.load %arg10[%c10] : memref<11xf32, #tpu.memory_space<smem>>
    %174 = vector.shape_cast %97 : vector<1x128xf32> to vector<1x1x128xf32>
    %cst_56 = arith.constant dense<0.000000e+00> : vector<1xf32>
    %175 = vector.multi_reduction <add>, %174, %cst_56 [1, 2] : vector<1x1x128xf32> to vector<1xf32>
    %176 = vector.shape_cast %175 : vector<1xf32> to vector<1x1x1xf32>
    %177 = vector.extract %176[0, 0, 0] : f32 from vector<1x1x1xf32>
    %178 = arith.addf %173, %177 : f32
    %c10_57 = arith.constant 10 : index
    %179 = memref.load %arg10[%c10_57] : memref<11xf32, #tpu.memory_space<smem>>
    memref.store %178, %arg10[%c10_57] : memref<11xf32, #tpu.memory_space<smem>>
    %c1_i32 = arith.constant 1 : i32
    %180 = arith.cmpi eq, %arg1, %c1_i32 : i32
    %181 = arith.extui %180 : i1 to i32
    %c0_i32_58 = arith.constant 0 : i32
    %182 = arith.cmpi ne, %181, %c0_i32_58 : i32
    scf.if %182 {
      %183 = tpu.iota {dimensions = array<i32: 0>} : vector<16x128xi32>
      %cst_59 = arith.constant 0.000000e+00 : f32
      %184 = vector.broadcast %cst_59 : f32 to vector<16x128xf32>
      %c0_i32_60 = arith.constant 0 : i32
      %185 = vector.broadcast %c0_i32_60 : i32 to vector<16x128xi32>
      %186 = arith.cmpi eq, %183, %185 : vector<16x128xi32>
      %c0_61 = arith.constant 0 : index
      %187 = memref.load %arg10[%c0_61] : memref<11xf32, #tpu.memory_space<smem>>
      %188 = vector.broadcast %187 : f32 to vector<16x128xf32>
      %189 = arith.select %186, %188, %184 : vector<16x128xi1>, vector<16x128xf32>
      %c1_i32_62 = arith.constant 1 : i32
      %190 = vector.broadcast %c1_i32_62 : i32 to vector<16x128xi32>
      %191 = arith.cmpi eq, %183, %190 : vector<16x128xi32>
      %c1_63 = arith.constant 1 : index
      %192 = memref.load %arg10[%c1_63] : memref<11xf32, #tpu.memory_space<smem>>
      %193 = vector.broadcast %192 : f32 to vector<16x128xf32>
      %194 = arith.select %191, %193, %189 : vector<16x128xi1>, vector<16x128xf32>
      %c2_i32 = arith.constant 2 : i32
      %195 = vector.broadcast %c2_i32 : i32 to vector<16x128xi32>
      %196 = arith.cmpi eq, %183, %195 : vector<16x128xi32>
      %c2_64 = arith.constant 2 : index
      %197 = memref.load %arg10[%c2_64] : memref<11xf32, #tpu.memory_space<smem>>
      %198 = vector.broadcast %197 : f32 to vector<16x128xf32>
      %199 = arith.select %196, %198, %194 : vector<16x128xi1>, vector<16x128xf32>
      %c3_i32 = arith.constant 3 : i32
      %200 = vector.broadcast %c3_i32 : i32 to vector<16x128xi32>
      %201 = arith.cmpi eq, %183, %200 : vector<16x128xi32>
      %c3_65 = arith.constant 3 : index
      %202 = memref.load %arg10[%c3_65] : memref<11xf32, #tpu.memory_space<smem>>
      %203 = vector.broadcast %202 : f32 to vector<16x128xf32>
      %204 = arith.select %201, %203, %199 : vector<16x128xi1>, vector<16x128xf32>
      %c4_i32_66 = arith.constant 4 : i32
      %205 = vector.broadcast %c4_i32_66 : i32 to vector<16x128xi32>
      %206 = arith.cmpi eq, %183, %205 : vector<16x128xi32>
      %c4_67 = arith.constant 4 : index
      %207 = memref.load %arg10[%c4_67] : memref<11xf32, #tpu.memory_space<smem>>
      %208 = vector.broadcast %207 : f32 to vector<16x128xf32>
      %209 = arith.select %206, %208, %204 : vector<16x128xi1>, vector<16x128xf32>
      %c5_i32 = arith.constant 5 : i32
      %210 = vector.broadcast %c5_i32 : i32 to vector<16x128xi32>
      %211 = arith.cmpi eq, %183, %210 : vector<16x128xi32>
      %c5_68 = arith.constant 5 : index
      %212 = memref.load %arg10[%c5_68] : memref<11xf32, #tpu.memory_space<smem>>
      %213 = vector.broadcast %212 : f32 to vector<16x128xf32>
      %214 = arith.select %211, %213, %209 : vector<16x128xi1>, vector<16x128xf32>
      %c6_i32 = arith.constant 6 : i32
      %215 = vector.broadcast %c6_i32 : i32 to vector<16x128xi32>
      %216 = arith.cmpi eq, %183, %215 : vector<16x128xi32>
      %c6_69 = arith.constant 6 : index
      %217 = memref.load %arg10[%c6_69] : memref<11xf32, #tpu.memory_space<smem>>
      %218 = vector.broadcast %217 : f32 to vector<16x128xf32>
      %219 = arith.select %216, %218, %214 : vector<16x128xi1>, vector<16x128xf32>
      %c7_i32 = arith.constant 7 : i32
      %220 = vector.broadcast %c7_i32 : i32 to vector<16x128xi32>
      %221 = arith.cmpi eq, %183, %220 : vector<16x128xi32>
      %c7_70 = arith.constant 7 : index
      %222 = memref.load %arg10[%c7_70] : memref<11xf32, #tpu.memory_space<smem>>
      %223 = vector.broadcast %222 : f32 to vector<16x128xf32>
      %224 = arith.select %221, %223, %219 : vector<16x128xi1>, vector<16x128xf32>
      %c8_i32 = arith.constant 8 : i32
      %225 = vector.broadcast %c8_i32 : i32 to vector<16x128xi32>
      %226 = arith.cmpi eq, %183, %225 : vector<16x128xi32>
      %c8_71 = arith.constant 8 : index
      %227 = memref.load %arg10[%c8_71] : memref<11xf32, #tpu.memory_space<smem>>
      %228 = vector.broadcast %227 : f32 to vector<16x128xf32>
      %229 = arith.select %226, %228, %224 : vector<16x128xi1>, vector<16x128xf32>
      %c9_i32 = arith.constant 9 : i32
      %230 = vector.broadcast %c9_i32 : i32 to vector<16x128xi32>
      %231 = arith.cmpi eq, %183, %230 : vector<16x128xi32>
      %c9_72 = arith.constant 9 : index
      %232 = memref.load %arg10[%c9_72] : memref<11xf32, #tpu.memory_space<smem>>
      %233 = vector.broadcast %232 : f32 to vector<16x128xf32>
      %234 = arith.select %231, %233, %229 : vector<16x128xi1>, vector<16x128xf32>
      %c10_i32 = arith.constant 10 : i32
      %235 = vector.broadcast %c10_i32 : i32 to vector<16x128xi32>
      %236 = arith.cmpi eq, %183, %235 : vector<16x128xi32>
      %c10_73 = arith.constant 10 : index
      %237 = memref.load %arg10[%c10_73] : memref<11xf32, #tpu.memory_space<smem>>
      %238 = vector.broadcast %237 : f32 to vector<16x128xf32>
      %239 = arith.select %236, %238, %234 : vector<16x128xi1>, vector<16x128xf32>
      %c0_74 = arith.constant 0 : index
      %c0_75 = arith.constant 0 : index
      %c0_76 = arith.constant 0 : index
      %240 = vector.load %arg9[%c0_74, %c0_75, %c0_76] : memref<1x16x128xf32, #tpu.memory_space<vmem>>, vector<1x16x128xf32>
      %241 = vector.shape_cast %240 : vector<1x16x128xf32> to vector<16x128xf32>
      %242 = vector.shape_cast %239 : vector<16x128xf32> to vector<1x16x128xf32>
      tpu.vector_store %arg9[%c0_74, %c0_75, %c0_76], %242 {strides = array<i32>} : memref<1x16x128xf32, #tpu.memory_space<vmem>>, vector<1x16x128xf32>,
    } else {
    }
    return
  }
  func.func @transform_0(%arg0: i32, %arg1: i32) -> (i32, i32, i32) {
    %c0_i32 = arith.constant 0 : i32
    %c0_i32_0 = arith.constant 0 : i32
    return %arg0, %c0_i32, %arg1 : i32, i32, i32
  }
  func.func @transform_1(%arg0: i32, %arg1: i32) -> (i32, i32) {
    %c0_i32 = arith.constant 0 : i32
    %c0_i32_0 = arith.constant 0 : i32
    %c0_i32_1 = arith.constant 0 : i32
    return %c0_i32, %c0_i32_0 : i32, i32
  }
  func.func @transform_2(%arg0: i32, %arg1: i32) -> (i32, i32) {
    %c0_i32 = arith.constant 0 : i32
    %c0_i32_0 = arith.constant 0 : i32
    %c0_i32_1 = arith.constant 0 : i32
    return %c0_i32, %c0_i32_0 : i32, i32
  }
  func.func @transform_3(%arg0: i32, %arg1: i32) -> (i32, i32, i32) {
    %c0_i32 = arith.constant 0 : i32
    %c0_i32_0 = arith.constant 0 : i32
    return %arg0, %c0_i32, %arg1 : i32, i32, i32
  }
  func.func @transform_4(%arg0: i32, %arg1: i32) -> (i32, i32, i32) {
    %c0_i32 = arith.constant 0 : i32
    %c0_i32_0 = arith.constant 0 : i32
    return %arg0, %c0_i32, %arg1 : i32, i32, i32
  }
  func.func @transform_5(%arg0: i32, %arg1: i32) -> (i32, i32, i32) {
    %c0_i32 = arith.constant 0 : i32
    %c0_i32_0 = arith.constant 0 : i32
    return %arg0, %c0_i32, %arg1 : i32, i32, i32
  }
  func.func @transform_6(%arg0: i32, %arg1: i32) -> (i32, i32, i32) {
    %c0_i32 = arith.constant 0 : i32
    %c0_i32_0 = arith.constant 0 : i32
    return %arg0, %c0_i32, %arg1 : i32, i32, i32
  }
  func.func @transform_7(%arg0: i32, %arg1: i32) -> (i32, i32, i32) {
    %c0_i32 = arith.constant 0 : i32
    %c0_i32_0 = arith.constant 0 : i32
    %c0_i32_1 = arith.constant 0 : i32
    return %arg0, %c0_i32, %c0_i32_0 : i32, i32, i32
  }
}

</mosaic_0001>

<llo_original>
// kernel: tpu_custom_call.1
$region0: #{tpu_custom_call.1}
  #allocation0 [shape = 'u32[]', space=smem, size = 0x4, offset = 0x4, fixed_abs, tag = 'smem constant byte address 0x4 - core index']
  #allocation1 [shape = 'u32[144,128]{1,0:T(1,128)}', space=vmem, size = 0x12000, scoped, tag = 'internal scratch']
  #allocation2 [shape = 'f32[11]{0:T(128)}', space=smem, size = 0x200, scoped, tag = 'scratch operand']
  %s0 = inlined_call_operand.vmem [shape: bf16[2,4,256], index: 0, kind: input, shape index: {}]
  %s1 = inlined_call_operand.vmem [shape: bf16[24,4], index: 1, kind: input, shape index: {}]
  %s2 = inlined_call_operand.vmem [shape: f32[24,1], index: 2, kind: input, shape index: {}]
  %s3 = inlined_call_operand.vmem [shape: s32[2,1,256], index: 3, kind: input, shape index: {}]
  %s4 = inlined_call_operand.vmem [shape: f32[2,1,256], index: 4, kind: input, shape index: {}]
  %s5 = inlined_call_operand.hbm [shape: f32[2,4,256], index: 5, kind: output, shape index: {0}]
  %s6 = inlined_call_operand.hbm [shape: f32[2,4,256], index: 6, kind: output, shape index: {1}]
  %s7 = inlined_call_operand.hbm [shape: f32[2,16,128], index: 7, kind: output, shape index: {2}]
  %8 = xla_tuple %s5, %s6, %s7
  %s9 = sld [smem:[#allocation0]]
  $region77: #{tpu_custom_call.1} parent=0
    _
  %s11 = ssub.s32 1, %s9
  %s12 = scalar_select 0, %s11, %s9
  $region1: #{tpu_custom_call.1} parent=0
    #allocation3 [shape = 'u8[4096]{0}', space=vmem, size = 0x1000, scoped, tag = 'output window, operand 0']
    #allocation4 [shape = 's32[2]{0}', space=sflag, size = 0x8, scoped, tag = 'scoped memory for tpu_custom_call.1']
    #allocation5 [shape = 'u8[4096]{0}', space=vmem, size = 0x1000, scoped, tag = 'output window, operand 1']
    #allocation6 [shape = 's32[2]{0}', space=sflag, size = 0x8, scoped, tag = 'scoped memory for tpu_custom_call.1']
    #allocation7 [shape = 'u8[16384]{0}', space=vmem, size = 0x4000, scoped, tag = 'output window, operand 2']
    %13 = vsyncpa [#allocation4], 0
    %s14 = scalar_lea.sflag [#allocation4], 1
    %15 = vsyncpa %s14, 0
    %16 = vsyncpa [#allocation6], 0
    %s17 = scalar_lea.sflag [#allocation6], 1
    %18 = vsyncpa %s17, 0
    loop: start=0, step=1, limit=6
    $region2: #{tpu_custom_call.1} parent=1 // loop_pre_header
      _
    $region3: #{tpu_custom_call.1} parent=1 // loop_header
      %s20 = sphi 0, %s24
      %p21 = scmp.ge.s32.totalorder %s20, 6
      %s27 = sphi 0, %s39
      %s28 = sphi 0, %s35
      %s29 = sphi 0, %s27
      %s30 = sphi 0, %s28
      %s31 = sphi 0, %s29
      %s32 = sphi 0, %s30
      %s44 = sphi 0, %s46
      %s47 = sphi 0, %s44
      %s48 = sphi 0, %s47
      %s64 = sphi 0, %s48
      %s68 = sphi 0, %s68
      %s70 = sphi 0, %s68
      %s71 = sphi 0, %s70
      %s85 = sphi 0, %s71
      %s89 = sphi 0, %s89
      %s91 = sphi 0, %s89
      %s92 = sphi 0, %s91
      %s106 = sphi 0, %s92
      %s114 = sphi 0, %s116
      %s117 = sphi 0, %s114
      %s118 = sphi 0, %s117
      %s134 = sphi 0, %s118
      %s142 = sphi 0, %s144
      %s145 = sphi 0, %s142
      %s146 = sphi 0, %s145
      %s162 = sphi 0, %s146
      %s170 = sphi 0, %s172
      %s173 = sphi 0, %s170
      %s174 = sphi 0, %s173
      %s190 = sphi 0, %s174
      %s198 = sphi 0, %s200
      %s201 = sphi 0, %s198
      %s202 = sphi 0, %s201
      %s218 = sphi 0, %s202
      %s224 = sphi 0, %s226
      %s227 = sphi 0, %s224
      %s228 = sphi 0, %s227
      %s244 = sphi 0, %s228
    $region4: #{tpu_custom_call.1} parent=1 // loop_header_branch
      %23 = sbr.rel (%p21) target = $region8
    $region5: #{tpu_custom_call.1} parent=1 // loop_body
      %s25 = ssub.s32 %s20, 1
      %s26 = ssub.s32 %s20, 2
      %s33 = sadd.s32 1, %s28
      %p34 = scmp.ge.s32.totalorder %s33, 2
      %s35 = scalar_select %p34, 0, %s33
      %s36 = sadd.s32 1, %s27
      %s37 = scalar_select %p34, %s36, %s27
      %p38 = scmp.ge.s32.totalorder %s37, 2
      %s39 = scalar_select %p38, 0, %s37
      %s40 = ssub.s32 %s27, %s39
      %s41 = ssub.s32 %s28, %s35
      %s42 = sor.u32 %s40, %s41
      %p43 = scmp.eq.s32.totalorder %s42, 0
      %s45 = sadd.s32 %s44, 1
      %s46 = scalar_select %p43, %s44, %s45
      %p49 = pneg %p43
      %p50 = scmp.eq.s32.totalorder %s20, 3
      %p51 = por %p49, %p50
      %p52 = scmp.ne.s32.totalorder %s44, %s47
      %p53 = scmp.eq.s32.totalorder %s20, 0
      %p54 = por %p52, %p53
      %p55 = scmp.ne.s32.totalorder %s44, %s47
      %p56 = scmp.eq.s32.totalorder %s25, 3
      %p57 = por %p55, %p56
      %p58 = scmp.ne.s32.totalorder %s47, %s48
      %p59 = scmp.eq.s32.totalorder %s25, 0
      %p60 = por %p58, %p59
      %p61 = scmp.ne.s32.totalorder %s47, %s48
      %p62 = scmp.eq.s32.totalorder %s26, 3
      %p63 = por %p61, %p62
      %p65 = scmp.ne.s32.totalorder %s48, %s64
      %p66 = scmp.eq.s32.totalorder %s26, 0
      %p67 = por %p65, %p66
      %s69 = sadd.s32 %s68, 1
      %p72 = scmp.eq.s32.totalorder %s20, 3
      %p73 = scmp.ne.s32.totalorder %s68, %s70
      %p74 = scmp.eq.s32.totalorder %s20, 0
      %p75 = por %p73, %p74
      %p76 = scmp.ne.s32.totalorder %s68, %s70
      %p77 = scmp.eq.s32.totalorder %s25, 3
      %p78 = por %p76, %p77
      %p79 = scmp.ne.s32.totalorder %s70, %s71
      %p80 = scmp.eq.s32.totalorder %s25, 0
      %p81 = por %p79, %p80
      %p82 = scmp.ne.s32.totalorder %s70, %s71
      %p83 = scmp.eq.s32.totalorder %s26, 3
      %p84 = por %p82, %p83
      %p86 = scmp.ne.s32.totalorder %s71, %s85
      %p87 = scmp.eq.s32.totalorder %s26, 0
      %p88 = por %p86, %p87
      %s90 = sadd.s32 %s89, 1
      %p93 = scmp.eq.s32.totalorder %s20, 3
      %p94 = scmp.ne.s32.totalorder %s89, %s91
      %p95 = scmp.eq.s32.totalorder %s20, 0
      %p96 = por %p94, %p95
      %p97 = scmp.ne.s32.totalorder %s89, %s91
      %p98 = scmp.eq.s32.totalorder %s25, 3
      %p99 = por %p97, %p98
      %p100 = scmp.ne.s32.totalorder %s91, %s92
      %p101 = scmp.eq.s32.totalorder %s25, 0
      %p102 = por %p100, %p101
      %p103 = scmp.ne.s32.totalorder %s91, %s92
      %p104 = scmp.eq.s32.totalorder %s26, 3
      %p105 = por %p103, %p104
      %p107 = scmp.ne.s32.totalorder %s92, %s106
      %p108 = scmp.eq.s32.totalorder %s26, 0
      %p109 = por %p107, %p108
      %s110 = ssub.s32 %s27, %s39
      %s111 = ssub.s32 %s28, %s35
      %s112 = sor.u32 %s110, %s111
      %p113 = scmp.eq.s32.totalorder %s112, 0
      %s115 = sadd.s32 %s114, 1
      %s116 = scalar_select %p113, %s114, %s115
      %p119 = pneg %p113
      %p120 = scmp.eq.s32.totalorder %s20, 3
      %p121 = por %p119, %p120
      %p122 = scmp.ne.s32.totalorder %s114, %s117
      %p123 = scmp.eq.s32.totalorder %s20, 0
      %p124 = por %p122, %p123
      %p125 = scmp.ne.s32.totalorder %s114, %s117
      %p126 = scmp.eq.s32.totalorder %s25, 3
      %p127 = por %p125, %p126
      %p128 = scmp.ne.s32.totalorder %s117, %s118
      %p129 = scmp.eq.s32.totalorder %s25, 0
      %p130 = por %p128, %p129
      %p131 = scmp.ne.s32.totalorder %s117, %s118
      %p132 = scmp.eq.s32.totalorder %s26, 3
      %p133 = por %p131, %p132
      %p135 = scmp.ne.s32.totalorder %s118, %s134
      %p136 = scmp.eq.s32.totalorder %s26, 0
      %p137 = por %p135, %p136
      %s138 = ssub.s32 %s27, %s39
      %s139 = ssub.s32 %s28, %s35
      %s140 = sor.u32 %s138, %s139
      %p141 = scmp.eq.s32.totalorder %s140, 0
      %s143 = sadd.s32 %s142, 1
      %s144 = scalar_select %p141, %s142, %s143
      %p147 = pneg %p141
      %p148 = scmp.eq.s32.totalorder %s20, 3
      %p149 = por %p147, %p148
      %p150 = scmp.ne.s32.totalorder %s142, %s145
      %p151 = scmp.eq.s32.totalorder %s20, 0
      %p152 = por %p150, %p151
      %p153 = scmp.ne.s32.totalorder %s142, %s145
      %p154 = scmp.eq.s32.totalorder %s25, 3
      %p155 = por %p153, %p154
      %p156 = scmp.ne.s32.totalorder %s145, %s146
      %p157 = scmp.eq.s32.totalorder %s25, 0
      %p158 = por %p156, %p157
      %p159 = scmp.ne.s32.totalorder %s145, %s146
      %p160 = scmp.eq.s32.totalorder %s26, 3
      %p161 = por %p159, %p160
      %p163 = scmp.ne.s32.totalorder %s146, %s162
      %p164 = scmp.eq.s32.totalorder %s26, 0
      %p165 = por %p163, %p164
      %s166 = ssub.s32 %s27, %s39
      %s167 = ssub.s32 %s28, %s35
      %s168 = sor.u32 %s166, %s167
      %p169 = scmp.eq.s32.totalorder %s168, 0
      %s171 = sadd.s32 %s170, 1
      %s172 = scalar_select %p169, %s170, %s171
      %p175 = pneg %p169
      %p176 = scmp.eq.s32.totalorder %s20, 3
      %p177 = por %p175, %p176
      %p178 = scmp.ne.s32.totalorder %s170, %s173
      %p179 = scmp.eq.s32.totalorder %s20, 0
      %p180 = por %p178, %p179
      %p181 = scmp.ne.s32.totalorder %s170, %s173
      %p182 = scmp.eq.s32.totalorder %s25, 3
      %p183 = por %p181, %p182
      %p184 = scmp.ne.s32.totalorder %s173, %s174
      %p185 = scmp.eq.s32.totalorder %s25, 0
      %p186 = por %p184, %p185
      %p187 = scmp.ne.s32.totalorder %s173, %s174
      %p188 = scmp.eq.s32.totalorder %s26, 3
      %p189 = por %p187, %p188
      %p191 = scmp.ne.s32.totalorder %s174, %s190
      %p192 = scmp.eq.s32.totalorder %s26, 0
      %p193 = por %p191, %p192
      %s194 = ssub.s32 %s27, %s39
      %s195 = ssub.s32 %s28, %s35
      %s196 = sor.u32 %s194, %s195
      %p197 = scmp.eq.s32.totalorder %s196, 0
      %s199 = sadd.s32 %s198, 1
      %s200 = scalar_select %p197, %s198, %s199
      %p203 = pneg %p197
      %p204 = scmp.eq.s32.totalorder %s20, 3
      %p205 = por %p203, %p204
      %p206 = scmp.ne.s32.totalorder %s198, %s201
      %p207 = scmp.eq.s32.totalorder %s20, 0
      %p208 = por %p206, %p207
      %p209 = scmp.ne.s32.totalorder %s198, %s201
      %p210 = scmp.eq.s32.totalorder %s25, 3
      %p211 = por %p209, %p210
      %p212 = scmp.ne.s32.totalorder %s201, %s202
      %p213 = scmp.eq.s32.totalorder %s25, 0
      %p214 = por %p212, %p213
      %p215 = scmp.ne.s32.totalorder %s201, %s202
      %p216 = scmp.eq.s32.totalorder %s26, 3
      %p217 = por %p215, %p216
      %p219 = scmp.ne.s32.totalorder %s202, %s218
      %p220 = scmp.eq.s32.totalorder %s26, 0
      %p221 = por %p219, %p220
      %s222 = ssub.s32 %s27, %s39
      %p223 = scmp.eq.s32.totalorder %s222, 0
      %s225 = sadd.s32 %s224, 1
      %s226 = scalar_select %p223, %s224, %s225
      %p229 = pneg %p223
      %p230 = scmp.eq.s32.totalorder %s20, 3
      %p231 = por %p229, %p230
      %p232 = scmp.ne.s32.totalorder %s224, %s227
      %p233 = scmp.eq.s32.totalorder %s20, 0
      %p234 = por %p232, %p233
      %p235 = scmp.ne.s32.totalorder %s224, %s227
      %p236 = scmp.eq.s32.totalorder %s25, 3
      %p237 = por %p235, %p236
      %p238 = scmp.ne.s32.totalorder %s227, %s228
      %p239 = scmp.eq.s32.totalorder %s25, 0
      %p240 = por %p238, %p239
      %p241 = scmp.ne.s32.totalorder %s227, %s228
      %p242 = scmp.eq.s32.totalorder %s26, 3
      %p243 = por %p241, %p242
      %p245 = scmp.ne.s32.totalorder %s228, %s244
      %p246 = scmp.eq.s32.totalorder %s26, 0
      %p247 = por %p245, %p246
      %p248 = scmp.le.s32.totalorder 1, %s20
      %p249 = scmp.lt.s32.totalorder %s20, 5
      %p250 = pnand %p248, %p249
      %p251 = pneg %p250
      // Predicated region
      $region9: #{tpu_custom_call.1} parent=5 // pred_check
        _
      $region10: #{tpu_custom_call.1} parent=5 // pred_check_branch
        %253 = sbr.rel (%p250) target = $region12
      $region11: #{tpu_custom_call.1} parent=5 // pred_region
        %s254 = ssub.s32 %s20, 1
        // Predicated region
        $region13: #{tpu_custom_call.1} parent=11 // pred_check
          %p255 = pneg %p81
        $region14: #{tpu_custom_call.1} parent=11 // pred_check_branch
          %257 = sbr.rel (%p255) target = $region16
        $region15: #{tpu_custom_call.1} parent=11 // pred_region
          _
        $region16: #{tpu_custom_call.1} parent=11 // pred_fallthru
          _
        // Predicated region
        $region17: #{tpu_custom_call.1} parent=11 // pred_check
          %p258 = pneg %p102
        $region18: #{tpu_custom_call.1} parent=11 // pred_check_branch
          %260 = sbr.rel (%p258) target = $region20
        $region19: #{tpu_custom_call.1} parent=11 // pred_region
          _
        $region20: #{tpu_custom_call.1} parent=11 // pred_fallthru
          _
      $region12: #{tpu_custom_call.1} parent=5 // pred_fallthru
        _
      %p261 = scmp.lt.s32.totalorder %s20, 4
      // Predicated region
      $region21: #{tpu_custom_call.1} parent=5 // pred_check
        %p262 = pneg %p261
      $region22: #{tpu_custom_call.1} parent=5 // pred_check_branch
        %264 = sbr.rel (%p262) target = $region24
      $region23: #{tpu_custom_call.1} parent=5 // pred_region
        // Predicated region
        $region25: #{tpu_custom_call.1} parent=23 // pred_check
          %p265 = pneg %p54
        $region26: #{tpu_custom_call.1} parent=23 // pred_check_branch
          %267 = sbr.rel (%p265) target = $region28
        $region27: #{tpu_custom_call.1} parent=23 // pred_region
          %p268 = scmp.lt.s32.totalorder %s27, 1
          %s269 = scalar_select %p268, %s27, 1
          %p270 = scmp.lt.s32.totalorder %s28, 1
          %s271 = scalar_select %p270, %s28, 1
          %s272 = smul.addr %s269, 2
          %s273 = sadd.s32 %s271, %s272
          %s274 = smul.addr %s273, 2
          %s275 = scalar_lea.vmem %s0, %s274
        $region28: #{tpu_custom_call.1} parent=23 // pred_fallthru
          _
        // Predicated region
        $region29: #{tpu_custom_call.1} parent=23 // pred_check
          %p276 = pneg %p124
        $region30: #{tpu_custom_call.1} parent=23 // pred_check_branch
          %278 = sbr.rel (%p276) target = $region32
        $region31: #{tpu_custom_call.1} parent=23 // pred_region
          %p279 = scmp.lt.s32.totalorder %s27, 1
          %s280 = scalar_select %p279, %s27, 1
          %p281 = scmp.lt.s32.totalorder %s28, 1
          %s282 = scalar_select %p281, %s28, 1
          %s283 = smul.addr %s280, 2
          %s284 = sadd.s32 %s282, %s283
          %s285 = scalar_lea.vmem %s3, %s284
        $region32: #{tpu_custom_call.1} parent=23 // pred_fallthru
          _
        // Predicated region
        $region33: #{tpu_custom_call.1} parent=23 // pred_check
          %p286 = pneg %p152
        $region34: #{tpu_custom_call.1} parent=23 // pred_check_branch
          %288 = sbr.rel (%p286) target = $region36
        $region35: #{tpu_custom_call.1} parent=23 // pred_region
          %p289 = scmp.lt.s32.totalorder %s27, 1
          %s290 = scalar_select %p289, %s27, 1
          %p291 = scmp.lt.s32.totalorder %s28, 1
          %s292 = scalar_select %p291, %s28, 1
          %s293 = smul.addr %s290, 2
          %s294 = sadd.s32 %s292, %s293
          %s295 = scalar_lea.vmem %s4, %s294
        $region36: #{tpu_custom_call.1} parent=23 // pred_fallthru
          _
      $region24: #{tpu_custom_call.1} parent=5 // pred_fallthru
        _
      %p296 = scmp.le.s32.totalorder 1, %s20
      %p297 = scmp.lt.s32.totalorder %s20, 5
      %p298 = pnand %p296, %p297
      %p299 = pneg %p298
      // Predicated region
      $region37: #{tpu_custom_call.1} parent=5 // pred_check
        _
      $region38: #{tpu_custom_call.1} parent=5 // pred_check_branch
        %301 = sbr.rel (%p298) target = $region40
      $region39: #{tpu_custom_call.1} parent=5 // pred_region
        %s302 = ssub.s32 %s20, 1
        %p303 = scmp.lt.s32.totalorder %s29, 1
        %s304 = scalar_select %p303, %s29, 1
        %p305 = scmp.lt.s32.totalorder %s30, 1
        %s306 = scalar_select %p305, %s30, 1
        %s307 = smul.addr %s304, 2
        %s308 = sadd.s32 %s306, %s307
        %s309 = smul.addr %s308, 2
        %s310 = scalar_lea.vmem %s0, %s309
        %p311 = pneg %p60
        %p312 = pneg %p57
        %p313 = pneg %p81
        %p314 = pneg %p78
        %p315 = pneg %p102
        %p316 = pneg %p99
        %p317 = scmp.lt.s32.totalorder %s29, 1
        %s318 = scalar_select %p317, %s29, 1
        %p319 = scmp.lt.s32.totalorder %s30, 1
        %s320 = scalar_select %p319, %s30, 1
        %s321 = smul.addr %s318, 2
        %s322 = sadd.s32 %s320, %s321
        %s323 = scalar_lea.vmem %s3, %s322
        %p324 = pneg %p130
        %p325 = pneg %p127
        %p326 = scmp.lt.s32.totalorder %s29, 1
        %s327 = scalar_select %p326, %s29, 1
        %p328 = scmp.lt.s32.totalorder %s30, 1
        %s329 = scalar_select %p328, %s30, 1
        %s330 = smul.addr %s327, 2
        %s331 = sadd.s32 %s329, %s330
        %s332 = scalar_lea.vmem %s4, %s331
        %p333 = pneg %p158
        %p334 = pneg %p155
        %p335 = pneg %p186
        %p336 = pneg %p183
        %s337 = sand.u32 %s173, 1
        %s338 = scalar_lea.sflag [#allocation4], %s337
        %s339 = sand.u32 %s173, 1
        %s340 = smul.addr %s339, 4
        %s341 = scalar_lea.vmem [#allocation3], %s340
        %p342 = pneg %p214
        %p343 = pneg %p211
        %s344 = sand.u32 %s25, 1
        %s345 = scalar_lea.sflag [#allocation6], %s344
        %s346 = sand.u32 %s201, 1
        %s347 = smul.addr %s346, 4
        %s348 = scalar_lea.vmem [#allocation5], %s347
        %p349 = pneg %p240
        %p350 = pneg %p237
        %s351 = sand.u32 %s25, 1
        %s352 = scalar_lea.sflag [#allocation6], %s351
        %s353 = sand.u32 %s227, 1
        %s354 = smul.addr %s353, 16
        %s355 = scalar_lea.vmem [#allocation7], %s354
        %p356 = scmp.lt.s32.totalorder %s29, 1
        %s357 = scalar_select %p356, %s29, 1
        %p358 = scmp.lt.s32.totalorder %s30, 1
        %s359 = scalar_select %p358, %s30, 1
        %s360 = smul.addr %s357, 2
        %s361 = sadd.s32 %s359, %s360
        %s362 = smul.addr %s361, 2
        %s363 = scalar_lea.vmem %s0, %s362
        %p364 = scmp.lt.s32.totalorder %s29, 1
        %s365 = scalar_select %p364, %s29, 1
        %p366 = scmp.lt.s32.totalorder %s30, 1
        %s367 = scalar_select %p366, %s30, 1
        %s368 = smul.addr %s365, 2
        %s369 = sadd.s32 %s367, %s368
        %s370 = scalar_lea.vmem %s3, %s369
        %p371 = scmp.lt.s32.totalorder %s29, 1
        %s372 = scalar_select %p371, %s29, 1
        %p373 = scmp.lt.s32.totalorder %s30, 1
        %s374 = scalar_select %p373, %s30, 1
        %s375 = smul.addr %s372, 2
        %s376 = sadd.s32 %s374, %s375
        %s377 = scalar_lea.vmem %s4, %s376
        %p379 = scmp.eq.s32.totalorder %s30, 0
        // Predicated region
        $region41: #{tpu_custom_call.1} parent=39 // pred_check
          %p380 = pneg %p379
        $region42: #{tpu_custom_call.1} parent=39 // pred_check_branch
          %382 = sbr.rel (%p380) target = $region44
        $region43: #{tpu_custom_call.1} parent=39 // pred_region
          %s383 = scalar_lea.smem [#allocation2], 0
          %384 = sst [smem:[%s383]] 0.0
          %s385 = scalar_lea.smem [#allocation2], 1
          %386 = sst [smem:[%s385]] 0.0
          %s387 = scalar_lea.smem [#allocation2], 2
          %388 = sst [smem:[%s387]] 0.0
          %s389 = scalar_lea.smem [#allocation2], 3
          %390 = sst [smem:[%s389]] 0.0
          %s391 = scalar_lea.smem [#allocation2], 4
          %392 = sst [smem:[%s391]] 0.0
          %s393 = scalar_lea.smem [#allocation2], 5
          %394 = sst [smem:[%s393]] 0.0
          %s395 = scalar_lea.smem [#allocation2], 6
          %396 = sst [smem:[%s395]] 0.0
          %s397 = scalar_lea.smem [#allocation2], 7
          %398 = sst [smem:[%s397]] 0.0
          %s399 = scalar_lea.smem [#allocation2], 8
          %400 = sst [smem:[%s399]] 0.0
          %s401 = scalar_lea.smem [#allocation2], 9
          %402 = sst [smem:[%s401]] 0.0
          %s403 = scalar_lea.smem [#allocation2], 10
          %404 = sst [smem:[%s403]] 0.0
        $region44: #{tpu_custom_call.1} parent=39 // pred_fallthru
          _
        %v405 = vld [vmem:[%s363] sm:$0x3]
        %v406 = vld [vmem:[%s1] sm:$0xf]
        %v407 = vld [vmem:[%s1 + $0x4] sm:$0xf]
        %v408 = vld [vmem:[%s1 + $0x8] sm:$0xf]
        %v409 = vld [vmem:[%s2] sm:$0xff]
        %v410 = vld [vmem:[%s2 + $0x8] sm:$0xff]
        %v411 = vld [vmem:[%s2 + $0x10] sm:$0xff]
        %413 = vset.pattern.permute.xlu0 0
        %414 = vperm.xlu0 %413, %v409
        %v415 = vpop.permute.xlu0 %414
        %418 = vset.pattern.permute.xlu0 0
        %419 = vperm.xlu0 %418, %v410
        %v420 = vpop.permute.xlu0 %419
        %423 = vset.pattern.permute.xlu0 0
        %424 = vperm.xlu0 %423, %v411
        %v425 = vpop.permute.xlu0 %424
        %v430 = vunpack.c.l.b16 %v406
        %v431 = vunpack.c.l.b16 %v407
        %v432 = vunpack.c.l.b16 %v408
        %v433 = vpack.c.b16 %v431, %v430
        %v434 = vpack.c.b16 %v432, %v432
        %vm435 = vcmask 31744
        %v437 = vsel %vm435, %v433, 0
        %v440 = vsel %vm435, %v434, 0
        %vm442 = vcmask 1041408
        %v444 = vsel %vm442, %v405, 0
        %446 = vmatprep.subr.bf16.mxu0 0
        %447 = vmatpush1.bf16.msra.mxu0 %v444
        %448 = vmatprep.subr.bf16.mxu0 0
        %449 = vmatpush1.bf16.msra.mxu0 0
        %450 = vmatprep.subr.bf16.mxu0 0
        %451 = vmatpush1.bf16.msra.mxu0 0
        %452 = vmatprep.subr.bf16.mxu0 0
        %453 = vmatpush1.bf16.msra.mxu0 0
        %454 = vmatprep.subr.bf16.mxu0 0
        %455 = vmatpush1.bf16.msra.mxu0 0
        %456 = vmatprep.subr.bf16.mxu0 0
        %457 = vmatpush1.bf16.msra.mxu0 0
        %458 = vmatprep.subr.bf16.mxu0 0
        %459 = vmatpush1.bf16.msra.mxu0 0
        %460 = vmatprep.subr.bf16.mxu0 0
        %461 = vmatpush1.bf16.msra.mxu0 0
        %462 = vmatprep.subr.bf16.mxu0 0
        %463 = vmatpush1.bf16.msra.mxu0 0
        %464 = vmatprep.subr.bf16.mxu0 0
        %465 = vmatpush1.bf16.msra.mxu0 0
        %466 = vmatprep.subr.bf16.mxu0 0
        %467 = vmatpush1.bf16.msra.mxu0 0
        %468 = vmatprep.subr.bf16.mxu0 0
        %469 = vmatpush1.bf16.msra.mxu0 0
        %470 = vmatprep.subr.bf16.mxu0 0
        %471 = vmatpush1.bf16.msra.mxu0 0
        %472 = vmatprep.subr.bf16.mxu0 0
        %473 = vmatpush1.bf16.msra.mxu0 0
        %474 = vmatprep.subr.bf16.mxu0 0
        %475 = vmatpush1.bf16.msra.mxu0 0
        %476 = vmatprep.subr.bf16.mxu0 0
        %477 = vmatpush1.bf16.msra.mxu0 0
        %478 = vmatprep.mubr.bf16.mxu0 0
        %479 = vmatmul.mubr.bf16.gmra.mrb[0].mxu0 %v437
        %v480 = vpop.f32.mrb[0].mxu0
        %v481 = vadd.f32 %v415, %v480
        %v482 = vpop.f32.mrb[0].mxu0
        %v483 = vpop.f32.mrb[0].mxu0
        %v484 = vadd.f32 %v420, %v483
        %v485 = vpop.f32.mrb[0].mxu0
        %486 = vmatprep.mubr.bf16.mxu0 0
        %487 = vmatmul.mubr.bf16.gmra.mrb[0].mxu0 %v440
        %v488 = vpop.f32.mrb[0].mxu0
        %v489 = vadd.f32 %v425, %v488
        %v490 = vpop.f32.mrb[0].mxu0
        %v491 = vpop.f32.mrb[0].mxu0
        %v492 = vpop.f32.mrb[0].mxu0
        %493 = vdwg.mxu0
        %494 = vst [vmem:[%s341] sm:$0xf] %v481
        %495 = vst [vmem:[%s348] sm:$0xf] %v484
        %v496 = vld [vmem:[%s370] sm:$0x1]
        %v497 = vld [vmem:[%s377] sm:$0x1]
        %v498 = vlaneseq
        %v499 = vshrl.u32 %v498, 7
        %v500 = vlaneseq
        %v501 = vshrl.u32 %v500, 7
        %v502 = vsub.s32 0, %v501
        %v503 = vrot.slane %v496, %v502
        %vm504 = vcmp.eq.s32.totalorder %v499, %v503
        %vm505 = vcmp.ge.s32.totalorder %v496, 0
        %vm506 = vcmp.ne.s32.totalorder %v496, 255
        %vm507 = vmand %vm505, %vm506
        %v508 = vsel %vm507, 1, 0
        %v509 = vcvt.s32.f32 %v508
        %vm510 = vcmask 1043456
        %v511 = vsel %vm510, %v481, -inf
        %v512 = vrot.slane %v511, 4
        %v513 = vmax.f32 %v511, %v512
        %v514 = vrot.slane %v513, 2
        %v515 = vmax.f32 %v513, %v514
        %v516 = vrot.slane %v515, 1
        %v517 = vmax.f32 %v515, %v516
        %v518 = vsub.f32 %v481, %v517
        %v519 = vmul.f32 %v518, 1.442695
        %v520 = vpow.pop %v519
        %v521 = vsel %vm510, %v520, 0.0
        %v522 = vrot.slane %v521, 4
        %v523 = vadd.f32 %v521, %v522
        %v524 = vrot.slane %v523, 2
        %v525 = vadd.f32 %v523, %v524
        %v526 = vrot.slane %v525, 1
        %v527 = vadd.f32 %v525, %v526
        %v528 = vlog2.pop %v527
        %v529 = vmul.f32 %v528, 0.6931472
        %v530 = vadd.f32 %v529, %v517
        %v531 = vsel %vm504, %v481, 0.0
        %v532 = vsel %vm510, %v531, 0.0
        %v533 = vrot.slane %v532, 4
        %v534 = vadd.f32 %v532, %v533
        %v535 = vrot.slane %v534, 2
        %v536 = vadd.f32 %v534, %v535
        %v537 = vrot.slane %v536, 1
        %v538 = vadd.f32 %v536, %v537
        %v539 = vsub.f32 %v530, %v538
        %v540 = vsel %vm510, %v484, -inf
        %v541 = vrot.slane %v540, 4
        %v542 = vmax.f32 %v540, %v541
        %v543 = vrot.slane %v542, 2
        %v544 = vmax.f32 %v542, %v543
        %v545 = vrot.slane %v544, 1
        %v546 = vmax.f32 %v544, %v545
        %v547 = vsub.f32 %v484, %v546
        %v548 = vmul.f32 %v547, 1.442695
        %v549 = vpow.pop %v548
        %v550 = vsel %vm510, %v549, 0.0
        %v551 = vrot.slane %v550, 4
        %v552 = vadd.f32 %v550, %v551
        %v553 = vrot.slane %v552, 2
        %v554 = vadd.f32 %v552, %v553
        %v555 = vrot.slane %v554, 1
        %v556 = vadd.f32 %v554, %v555
        %v557 = vlog2.pop %v556
        %v558 = vmul.f32 %v557, 0.6931472
        %v559 = vadd.f32 %v558, %v546
        %v560 = vsel %vm504, %v484, 0.0
        %v561 = vsel %vm510, %v560, 0.0
        %v562 = vrot.slane %v561, 4
        %v563 = vadd.f32 %v561, %v562
        %v564 = vrot.slane %v563, 2
        %v565 = vadd.f32 %v563, %v564
        %v566 = vrot.slane %v565, 1
        %v567 = vadd.f32 %v565, %v566
        %v568 = vsub.f32 %v559, %v567
        %vm569 = vcmp.gt.f32.partialorder %v489, 0.4054651
        %vm570 = vmand %vm507, %vm569
        %v571 = vsel %vm570, 1, 0
        %v572 = vcvt.s32.f32 %v571
        %vm573 = vcmp.eq.f32.partialorder %v484, %v546
        %v574 = vsel %vm573, %v499, 4
        %v575 = vsel %vm510, %v574, 2147483647
        %v576 = vrot.slane %v575, 4
        %vm577 = vcmp.lt.s32.totalorder %v575, %v576
        %v578 = vsel %vm577, %v575, %v576
        %v579 = vrot.slane %v578, 2
        %vm580 = vcmp.lt.s32.totalorder %v578, %v579
        %v581 = vsel %vm580, %v578, %v579
        %v582 = vrot.slane %v581, 1
        %vm583 = vcmp.lt.s32.totalorder %v581, %v582
        %v584 = vsel %vm583, %v581, %v582
        %v585 = vsel %vm505, 1, 0
        %v586 = vcvt.s32.f32 %v585
        %vm587 = vcmp.eq.s32.totalorder %v584, %v496
        %vm588 = vmand %vm505, %vm587
        %v589 = vsel %vm588, 1, 0
        %v590 = vcvt.s32.f32 %v589
        %v591 = vmax.f32 %v489, 0.0
        %v592 = vmul.f32 %v489, %v497
        %v593 = vsub.f32 %v591, %v592
        %v594 = vand.u32 2147483647, %v489
        %v595 = vsub.f32 0.0, %v594
        %v596 = vmul.f32 %v595, 1.442695
        %v597 = vpow.pop %v596
        %v598 = vadd.f32 %v597, 1.0
        %v599 = vlog2.pop %v598
        %v600 = vmul.f32 %v599, 0.6931472
        %v601 = vmul.f32 -0.5, %v597
        %v602 = vadd.f32 %v601, 1.0
        %v603 = vmul.f32 %v602, %v597
        %v604 = vand.u32 2147483647, %v597
        %vm605 = vcmp.lt.f32.partialorder %v604, 0.0004427343
        %v606 = vsel %vm605, %v603, %v600
        %v607 = vadd.f32 %v593, %v606
        %vm608 = vcmp.eq.f32.partialorder %v497, 1.0
        %v609 = vsel %vm608, 1, 0
        %v610 = vcvt.s32.f32 %v609
        %vm611 = vcmp.eq.f32.partialorder %v497, 0.0
        %v612 = vsel %vm611, 1, 0
        %v613 = vcvt.s32.f32 %v612
        %v614 = vmul.f32 %v539, %v509
        %v615 = vmul.f32 %v568, %v509
        %v616 = vmul.f32 %v568, %v572
        %v617 = vmul.f32 %v607, %v610
        %v618 = vmul.f32 %v607, %v613
        %s619 = sld [smem:[#allocation2]]
        %vm620 = vcmask 1040384
        %v621 = vsel %vm620, %v614, 0.0
        %622 = vadd.xlane.f32.xlu0 %v621
        %v623 = vpop.xlane.xlu0 %622
        %v624 = vrot.slane %v623, 4
        %v625 = vadd.f32 %v623, %v624
        %v626 = vrot.slane %v625, 2
        %v627 = vadd.f32 %v625, %v626
        %v628 = vrot.slane %v627, 1
        %v629 = vadd.f32 %v627, %v628
        %s630 = vtos %v629
        %s631 = sadd.f32 %s619, %s630
        %s632 = scalar_lea.smem [#allocation2], 0
        %633 = sst [smem:[%s632]] %s631
        %s634 = sld [smem:[#allocation2 + $0x1]]
        %v635 = vsel %vm620, %v615, 0.0
        %636 = vadd.xlane.f32.xlu0 %v635
        %v637 = vpop.xlane.xlu0 %636
        %v638 = vrot.slane %v637, 4
        %v639 = vadd.f32 %v637, %v638
        %v640 = vrot.slane %v639, 2
        %v641 = vadd.f32 %v639, %v640
        %v642 = vrot.slane %v641, 1
        %v643 = vadd.f32 %v641, %v642
        %s644 = vtos %v643
        %s645 = sadd.f32 %s634, %s644
        %s646 = scalar_lea.smem [#allocation2], 1
        %647 = sst [smem:[%s646]] %s645
        %s648 = sld [smem:[#allocation2 + $0x2]]
        %v649 = vsel %vm620, %v509, 0.0
        %650 = vadd.xlane.f32.xlu0 %v649
        %v651 = vpop.xlane.xlu0 %650
        %v652 = vrot.slane %v651, 4
        %v653 = vadd.f32 %v651, %v652
        %v654 = vrot.slane %v653, 2
        %v655 = vadd.f32 %v653, %v654
        %v656 = vrot.slane %v655, 1
        %v657 = vadd.f32 %v655, %v656
        %s658 = vtos %v657
        %s659 = sadd.f32 %s648, %s658
        %s660 = scalar_lea.smem [#allocation2], 2
        %661 = sst [smem:[%s660]] %s659
        %s662 = sld [smem:[#allocation2 + $0x3]]
        %v663 = vsel %vm620, %v616, 0.0
        %664 = vadd.xlane.f32.xlu0 %v663
        %v665 = vpop.xlane.xlu0 %664
        %v666 = vrot.slane %v665, 4
        %v667 = vadd.f32 %v665, %v666
        %v668 = vrot.slane %v667, 2
        %v669 = vadd.f32 %v667, %v668
        %v670 = vrot.slane %v669, 1
        %v671 = vadd.f32 %v669, %v670
        %s672 = vtos %v671
        %s673 = sadd.f32 %s662, %s672
        %s674 = scalar_lea.smem [#allocation2], 3
        %675 = sst [smem:[%s674]] %s673
        %s676 = sld [smem:[#allocation2 + $0x4]]
        %v677 = vsel %vm620, %v572, 0.0
        %678 = vadd.xlane.f32.xlu0 %v677
        %v679 = vpop.xlane.xlu0 %678
        %v680 = vrot.slane %v679, 4
        %v681 = vadd.f32 %v679, %v680
        %v682 = vrot.slane %v681, 2
        %v683 = vadd.f32 %v681, %v682
        %v684 = vrot.slane %v683, 1
        %v685 = vadd.f32 %v683, %v684
        %s686 = vtos %v685
        %s687 = sadd.f32 %s676, %s686
        %s688 = scalar_lea.smem [#allocation2], 4
        %689 = sst [smem:[%s688]] %s687
        %s690 = sld [smem:[#allocation2 + $0x5]]
        %v691 = vsel %vm620, %v590, 0.0
        %692 = vadd.xlane.f32.xlu0 %v691
        %v693 = vpop.xlane.xlu0 %692
        %v694 = vrot.slane %v693, 4
        %v695 = vadd.f32 %v693, %v694
        %v696 = vrot.slane %v695, 2
        %v697 = vadd.f32 %v695, %v696
        %v698 = vrot.slane %v697, 1
        %v699 = vadd.f32 %v697, %v698
        %s700 = vtos %v699
        %s701 = sadd.f32 %s690, %s700
        %s702 = scalar_lea.smem [#allocation2], 5
        %703 = sst [smem:[%s702]] %s701
        %s704 = sld [smem:[#allocation2 + $0x6]]
        %v705 = vsel %vm620, %v586, 0.0
        %706 = vadd.xlane.f32.xlu0 %v705
        %v707 = vpop.xlane.xlu0 %706
        %v708 = vrot.slane %v707, 4
        %v709 = vadd.f32 %v707, %v708
        %v710 = vrot.slane %v709, 2
        %v711 = vadd.f32 %v709, %v710
        %v712 = vrot.slane %v711, 1
        %v713 = vadd.f32 %v711, %v712
        %s714 = vtos %v713
        %s715 = sadd.f32 %s704, %s714
        %s716 = scalar_lea.smem [#allocation2], 6
        %717 = sst [smem:[%s716]] %s715
        %s718 = sld [smem:[#allocation2 + $0x7]]
        %v719 = vsel %vm620, %v617, 0.0
        %720 = vadd.xlane.f32.xlu0 %v719
        %v721 = vpop.xlane.xlu0 %720
        %v722 = vrot.slane %v721, 4
        %v723 = vadd.f32 %v721, %v722
        %v724 = vrot.slane %v723, 2
        %v725 = vadd.f32 %v723, %v724
        %v726 = vrot.slane %v725, 1
        %v727 = vadd.f32 %v725, %v726
        %s728 = vtos %v727
        %s729 = sadd.f32 %s718, %s728
        %s730 = scalar_lea.smem [#allocation2], 7
        %731 = sst [smem:[%s730]] %s729
        %s732 = sld [smem:[#allocation2 + $0x8]]
        %v733 = vsel %vm620, %v618, 0.0
        %734 = vadd.xlane.f32.xlu0 %v733
        %v735 = vpop.xlane.xlu0 %734
        %v736 = vrot.slane %v735, 4
        %v737 = vadd.f32 %v735, %v736
        %v738 = vrot.slane %v737, 2
        %v739 = vadd.f32 %v737, %v738
        %v740 = vrot.slane %v739, 1
        %v741 = vadd.f32 %v739, %v740
        %s742 = vtos %v741
        %s743 = sadd.f32 %s732, %s742
        %s744 = scalar_lea.smem [#allocation2], 8
        %745 = sst [smem:[%s744]] %s743
        %s746 = sld [smem:[#allocation2 + $0x9]]
        %v747 = vsel %vm620, %v610, 0.0
        %748 = vadd.xlane.f32.xlu0 %v747
        %v749 = vpop.xlane.xlu0 %748
        %v750 = vrot.slane %v749, 4
        %v751 = vadd.f32 %v749, %v750
        %v752 = vrot.slane %v751, 2
        %v753 = vadd.f32 %v751, %v752
        %v754 = vrot.slane %v753, 1
        %v755 = vadd.f32 %v753, %v754
        %s756 = vtos %v755
        %s757 = sadd.f32 %s746, %s756
        %s758 = scalar_lea.smem [#allocation2], 9
        %759 = sst [smem:[%s758]] %s757
        %s760 = sld [smem:[#allocation2 + $0xa]]
        %v761 = vsel %vm620, %v613, 0.0
        %762 = vadd.xlane.f32.xlu0 %v761
        %v763 = vpop.xlane.xlu0 %762
        %v764 = vrot.slane %v763, 4
        %v765 = vadd.f32 %v763, %v764
        %v766 = vrot.slane %v765, 2
        %v767 = vadd.f32 %v765, %v766
        %v768 = vrot.slane %v767, 1
        %v769 = vadd.f32 %v767, %v768
        %s770 = vtos %v769
        %s771 = sadd.f32 %s760, %s770
        %s772 = scalar_lea.smem [#allocation2], 10
        %773 = sst [smem:[%s772]] %s771
        %p774 = scmp.eq.s32.totalorder %s30, 1
        // Predicated region
        $region45: #{tpu_custom_call.1} parent=39 // pred_check
          %p775 = pneg %p774
        $region46: #{tpu_custom_call.1} parent=39 // pred_check_branch
          %777 = sbr.rel (%p775) target = $region48
        $region47: #{tpu_custom_call.1} parent=39 // pred_region
          %v778 = vadd.s32 %v499, 8
          %vm779 = vcmp.eq.s32.totalorder %v499, 0
          %vm780 = vcmp.eq.s32.totalorder %v778, 0
          %s781 = sld [smem:[#allocation2]]
          %v782 = vstv %s781
          %v783 = vsel %vm779, %v782, 0.0
          %v784 = vsel %vm780, %v782, 0.0
          %vm785 = vcmp.eq.s32.totalorder %v499, 1
          %vm786 = vcmp.eq.s32.totalorder %v778, 1
          %s787 = sld [smem:[#allocation2 + $0x1]]
          %v788 = vstv %s787
          %v789 = vsel %vm785, %v788, %v783
          %v790 = vsel %vm786, %v788, %v784
          %vm791 = vcmp.eq.s32.totalorder %v499, 2
          %vm792 = vcmp.eq.s32.totalorder %v778, 2
          %s793 = sld [smem:[#allocation2 + $0x2]]
          %v794 = vstv %s793
          %v795 = vsel %vm791, %v794, %v789
          %v796 = vsel %vm792, %v794, %v790
          %vm797 = vcmp.eq.s32.totalorder %v499, 3
          %vm798 = vcmp.eq.s32.totalorder %v778, 3
          %s799 = sld [smem:[#allocation2 + $0x3]]
          %v800 = vstv %s799
          %v801 = vsel %vm797, %v800, %v795
          %v802 = vsel %vm798, %v800, %v796
          %vm803 = vcmp.eq.s32.totalorder %v499, 4
          %vm804 = vcmp.eq.s32.totalorder %v778, 4
          %s805 = sld [smem:[#allocation2 + $0x4]]
          %v806 = vstv %s805
          %v807 = vsel %vm803, %v806, %v801
          %v808 = vsel %vm804, %v806, %v802
          %vm809 = vcmp.eq.s32.totalorder %v499, 5
          %vm810 = vcmp.eq.s32.totalorder %v778, 5
          %s811 = sld [smem:[#allocation2 + $0x5]]
          %v812 = vstv %s811
          %v813 = vsel %vm809, %v812, %v807
          %v814 = vsel %vm810, %v812, %v808
          %vm815 = vcmp.eq.s32.totalorder %v499, 6
          %vm816 = vcmp.eq.s32.totalorder %v778, 6
          %s817 = sld [smem:[#allocation2 + $0x6]]
          %v818 = vstv %s817
          %v819 = vsel %vm815, %v818, %v813
          %v820 = vsel %vm816, %v818, %v814
          %vm821 = vcmp.eq.s32.totalorder %v499, 7
          %vm822 = vcmp.eq.s32.totalorder %v778, 7
          %s823 = sld [smem:[#allocation2 + $0x7]]
          %v824 = vstv %s823
          %v825 = vsel %vm821, %v824, %v819
          %v826 = vsel %vm822, %v824, %v820
          %vm827 = vcmp.eq.s32.totalorder %v499, 8
          %vm828 = vcmp.eq.s32.totalorder %v778, 8
          %s829 = sld [smem:[#allocation2 + $0x8]]
          %v830 = vstv %s829
          %v831 = vsel %vm827, %v830, %v825
          %v832 = vsel %vm828, %v830, %v826
          %vm833 = vcmp.eq.s32.totalorder %v499, 9
          %vm834 = vcmp.eq.s32.totalorder %v778, 9
          %s835 = sld [smem:[#allocation2 + $0x9]]
          %v836 = vstv %s835
          %v837 = vsel %vm833, %v836, %v831
          %v838 = vsel %vm834, %v836, %v832
          %vm839 = vcmp.eq.s32.totalorder %v499, 10
          %vm840 = vcmp.eq.s32.totalorder %v778, 10
          %s841 = sld [smem:[#allocation2 + $0xa]]
          %v842 = vstv %s841
          %v843 = vsel %vm839, %v842, %v837
          %v844 = vsel %vm840, %v842, %v838
          %845 = vst [vmem:[%s355] sm:$0xff] %v843
          %846 = vst [vmem:[%s355 + $0x8] sm:$0xff] %v844
        $region48: #{tpu_custom_call.1} parent=39 // pred_fallthru
          _
        %s847 = sand.u32 %s173, 1
        %s848 = scalar_lea.sflag [#allocation4], %s847
        %s849 = sand.u32 %s173, 1
        %s850 = smul.addr %s849, 4
        %s851 = scalar_lea.vmem [#allocation3], %s850
        %s852 = sand.u32 %s25, 1
        %s853 = scalar_lea.sflag [#allocation6], %s852
        %s854 = sand.u32 %s201, 1
        %s855 = smul.addr %s854, 4
        %s856 = scalar_lea.vmem [#allocation5], %s855
        %s857 = sand.u32 %s25, 1
        %s858 = scalar_lea.sflag [#allocation6], %s857
        %s859 = sand.u32 %s227, 1
        %s860 = smul.addr %s859, 16
        %s861 = scalar_lea.vmem [#allocation7], %s860
        // Predicated region
        $region49: #{tpu_custom_call.1} parent=39 // pred_check
          %p862 = pneg %p183
        $region50: #{tpu_custom_call.1} parent=39 // pred_check_branch
          %864 = sbr.rel (%p862) target = $region52
        $region51: #{tpu_custom_call.1} parent=39 // pred_region
          %s866 = ssub.s32 64, 64
          %867 = vsyncadd %s848, %s866
          %s868 = smul.addr %s29, 2
          %s869 = sadd.s32 %s30, %s868
          %s870 = smul.addr %s869, 64
          %s871 = scalar_lea.hbm %s5, %s870
          %s873 = sshll.u32 %s851, 4
          %s874 = int_to_ptr.vmem [resolvable:$true] %s873
          %876 = dma.vmem_to_hbm [thread:$0]  %s874, 64, %s871, %s848
        $region52: #{tpu_custom_call.1} parent=39 // pred_fallthru
          _
        // Predicated region
        $region53: #{tpu_custom_call.1} parent=39 // pred_check
          %p877 = pneg %p211
        $region54: #{tpu_custom_call.1} parent=39 // pred_check_branch
          %879 = sbr.rel (%p877) target = $region56
        $region55: #{tpu_custom_call.1} parent=39 // pred_region
          %s881 = ssub.s32 64, 64
          %882 = vsyncadd %s853, %s881
          %s883 = smul.addr %s29, 2
          %s884 = sadd.s32 %s30, %s883
          %s885 = smul.addr %s884, 64
          %s886 = scalar_lea.hbm %s6, %s885
          %s888 = sshll.u32 %s856, 4
          %s889 = int_to_ptr.vmem [resolvable:$true] %s888
          %891 = dma.vmem_to_hbm [thread:$0]  %s889, 64, %s886, %s853
        $region56: #{tpu_custom_call.1} parent=39 // pred_fallthru
          _
        // Predicated region
        $region57: #{tpu_custom_call.1} parent=39 // pred_check
          %p892 = pneg %p237
        $region58: #{tpu_custom_call.1} parent=39 // pred_check_branch
          %894 = sbr.rel (%p892) target = $region60
        $region59: #{tpu_custom_call.1} parent=39 // pred_region
          %s896 = ssub.s32 256, 256
          %897 = vsyncadd %s858, %s896
          %s898 = smul.addr %s29, 2
          %s899 = smul.addr %s898, 128
          %s900 = scalar_lea.hbm %s7, %s899
          %s901 = sshll.u32 %s861, 4
          %s902 = int_to_ptr.vmem [resolvable:$true] %s901
          %907 = dma.vmem_to_hbm [thread:$0]  %s902, 256, %s900, %s858, 128, 128, 8
        $region60: #{tpu_custom_call.1} parent=39 // pred_fallthru
          _
      $region40: #{tpu_custom_call.1} parent=5 // pred_fallthru
        _
      %p908 = scmp.le.s32.totalorder 2, %s20
      // Predicated region
      $region61: #{tpu_custom_call.1} parent=5 // pred_check
        %p909 = pneg %p908
      $region62: #{tpu_custom_call.1} parent=5 // pred_check_branch
        %911 = sbr.rel (%p909) target = $region64
      $region63: #{tpu_custom_call.1} parent=5 // pred_region
        %s912 = ssub.s32 %s20, 2
        // Predicated region
        $region65: #{tpu_custom_call.1} parent=63 // pred_check
          %p913 = pneg %p189
        $region66: #{tpu_custom_call.1} parent=63 // pred_check_branch
          %915 = sbr.rel (%p913) target = $region68
        $region67: #{tpu_custom_call.1} parent=63 // pred_region
          %s916 = sand.u32 %s174, 1
          %s917 = scalar_lea.sflag [#allocation4], %s916
          %s918 = sand.u32 %s174, 1
          %s919 = smul.addr %s918, 4
          %s920 = scalar_lea.vmem [#allocation3], %s919
          %921 = dma.done %s917, 64
        $region68: #{tpu_custom_call.1} parent=63 // pred_fallthru
          _
        // Predicated region
        $region69: #{tpu_custom_call.1} parent=63 // pred_check
          %p922 = pneg %p217
        $region70: #{tpu_custom_call.1} parent=63 // pred_check_branch
          %924 = sbr.rel (%p922) target = $region72
        $region71: #{tpu_custom_call.1} parent=63 // pred_region
          %s925 = sand.u32 %s26, 1
          %s926 = scalar_lea.sflag [#allocation6], %s925
          %s927 = sand.u32 %s202, 1
          %s928 = smul.addr %s927, 4
          %s929 = scalar_lea.vmem [#allocation5], %s928
          %930 = dma.done %s926, 64
        $region72: #{tpu_custom_call.1} parent=63 // pred_fallthru
          _
        // Predicated region
        $region73: #{tpu_custom_call.1} parent=63 // pred_check
          %p931 = pneg %p243
        $region74: #{tpu_custom_call.1} parent=63 // pred_check_branch
          %933 = sbr.rel (%p931) target = $region76
        $region75: #{tpu_custom_call.1} parent=63 // pred_region
          %s934 = sand.u32 %s26, 1
          %s935 = scalar_lea.sflag [#allocation6], %s934
          %s936 = sand.u32 %s228, 1
          %s937 = smul.addr %s936, 16
          %s938 = scalar_lea.vmem [#allocation7], %s937
          %939 = dma.done %s935, 256
        $region76: #{tpu_custom_call.1} parent=63 // pred_fallthru
          _
      $region64: #{tpu_custom_call.1} parent=5 // pred_fallthru
        _
    $region6: #{tpu_custom_call.1} parent=1 // loop_footer
      %s24 = sadd.s32 1, %s20
    $region7: #{tpu_custom_call.1} parent=1 // loop_footer_branch
      %19 = sbr.rel target = $region3
    $region8: #{tpu_custom_call.1} parent=1 // loop_exit
      _
    %940 = vsyncpa [#allocation4], 1
    %s941 = scalar_lea.sflag [#allocation4], 1
    %942 = vsyncpa %s941, 1
    %943 = vsyncpa [#allocation6], 1
    %s944 = scalar_lea.sflag [#allocation6], 1
    %945 = vsyncpa %s944, 1

</llo_original>
